<compile_context>
chip_gen: v5e
topology: v5e:2x2
jax: 0.10.0
libtpu: 0.0.40
codegen_flags: <defaults>
</compile_context>

<pallas_src>
import functools

import jax
import jax.numpy as jnp
from jax.experimental import pallas as pl
from jax.experimental.pallas import tpu as pltpu  # noqa: F401  (TPU backend)

# ----------------------------- config -------------------------------------
D_MODEL = 32
D_FF = 64
NUM_HEADS = 4
D_HEAD = D_MODEL // NUM_HEADS
NUM_LAYERS = 2
EPSILON = 1e-6
DROPOUT = 0.0  # eval mode -> identity

BATCH = 2
SEQ = 8

NEG_INF = -1e30

# Raw (PyTorch-structured) parameter order for one layer:
#   masked attn : wq1 bq1 wk1 bk1 wv1 bv1 wo1 bo1
#   ln1         : g1 be1
#   cross attn  : wq2 bq2 wk2 bk2 wv2 bv2 wo2 bo2
#   ln2         : g2 be2
#   ff          : w1 bw1 w2 bw2
#   ln3         : g3 be3
N_RAW_PARAMS_PER_LAYER = 26

# Packed bias/LN vector row order inside the per-layer `vecs` array:
#   0 bqkv1(3D) 1 bo1 2 g1 3 be1 4 bqk2(2D) 5 bv2 6 bo2 7 g2 8 be2
#   9 bw1(D_FF) 10 bw2 11 g3 12 be3
_VEC_W = 3 * D_MODEL


# ----------------------------- kernel --------------------------------------
def _layernorm(v, gamma, beta):
    mu = jnp.mean(v, axis=-1, keepdims=True)
    var = jnp.mean((v - mu) ** 2, axis=-1, keepdims=True)
    return (v - mu) * jax.lax.rsqrt(var + EPSILON) * gamma + beta


def _attention(q, k, v, wo, bo, bias, blkmask):
    """All-heads-at-once attention over flattened rows.

    q, k, v : (N, D) f32 projected streams (q already pre-scaled by 1/sqrt(dh))
    wo      : (D, D) bf16 output projection weight
    bo      : (1, D) f32 output projection bias
    bias    : (N, H*N) f32 additive mask, head blocks side-by-side in lanes
    blkmask : (H*N, D) f32 0/1 block-diagonal head mask
    """
    # Block-diagonal K / V: row h*N+m holds K[m]/V[m] restricted to head h's
    # feature columns. One sublane concat + one VPU multiply each (f32).
    kb = (jnp.concatenate([k] * NUM_HEADS, axis=0) * blkmask)      # (HN, D)
    vb = (jnp.concatenate([v] * NUM_HEADS, axis=0) * blkmask)      # (HN, D)

    # Scores for all heads side by side: ONE MXU matmul, lane-dense (N, H*N).
    s = jax.lax.dot_general(
        q.astype(jnp.bfloat16), kb.astype(jnp.bfloat16),
        (((1,), (1,)), ((), ())),
        preferred_element_type=jnp.float32) + bias

    # Shared row max across all heads is safe: the per-head offset cancels in
    # the per-head normalisation below.
    m = jnp.max(s, axis=-1, keepdims=True)
    e = jnp.exp(s - m)                       # masked entries underflow to 0

    # ONE matmul yields [unnormalised head outputs | per-head softmax sums].
    vm = jnp.concatenate([vb, blkmask], axis=1).astype(jnp.bfloat16)  # (HN,2D)
    ol = jnp.dot(e.astype(jnp.bfloat16), vm,
                 preferred_element_type=jnp.float32)                  # (N, 2D)
    o = ol[:, 0:D_MODEL] / ol[:, D_MODEL:2 * D_MODEL]                 # (N, D)

    # Single output projection on the lane-concatenated head outputs.
    return jnp.dot(o.astype(jnp.bfloat16), wo,
                   preferred_element_type=jnp.float32) + bo


def _decoder_layer(l, x, enc_bf, wmain_ref, wff2_ref, vecs_ref,
                   self_bias, cross_bias, blkmask):
    D = D_MODEL
    vecs = vecs_ref[l]                                  # (13, 3D) f32, tiny

    bqkv1 = vecs[0:1, 0:3 * D]
    bo1, g1, be1 = vecs[1:2, 0:D], vecs[2:3, 0:D], vecs[3:4, 0:D]
    bqk2 = vecs[4:5, 0:2 * D]
    bv2, bo2 = vecs[5:6, 0:D], vecs[6:7, 0:D]
    g2, be2 = vecs[7:8, 0:D], vecs[8:9, 0:D]
    bw1 = vecs[9:10, 0:D_FF]
    bw2, g3, be3 = vecs[10:11, 0:D], vecs[11:12, 0:D], vecs[12:13, 0:D]

    # ---- masked self-attention + residual + LN1 (fused QKV projection) ----
    residual = x
    qkv = jnp.dot(x.astype(jnp.bfloat16), wmain_ref[l, :, 0:3 * D],
                  preferred_element_type=jnp.float32) + bqkv1
    h = _attention(qkv[:, 0:D], qkv[:, D:2 * D], qkv[:, 2 * D:3 * D],
                   wmain_ref[l, :, 3 * D:4 * D], bo1, self_bias, blkmask)
    x = _layernorm(h + residual, g1, be1)

    # ---- cross-attention: q = enc, k = enc, v = x (matches reference) -----
    residual = x
    qk = jnp.dot(enc_bf, wmain_ref[l, :, 4 * D:6 * D],
                 preferred_element_type=jnp.float32) + bqk2
    v = jnp.dot(x.astype(jnp.bfloat16), wmain_ref[l, :, 6 * D:7 * D],
                preferred_element_type=jnp.float32) + bv2
    h = _attention(qk[:, 0:D], qk[:, D:2 * D], v,
                   wmain_ref[l, :, 7 * D:8 * D], bo2, cross_bias, blkmask)
    x = _layernorm(h + residual, g2, be2)

    # ---- feed-forward (linear -> relu -> [dropout=identity] -> linear) ----
    residual = x
    ffh = jnp.maximum(
        jnp.dot(x.astype(jnp.bfloat16), wmain_ref[l, :, 8 * D:8 * D + D_FF],
                preferred_element_type=jnp.float32) + bw1, 0.0)
    ffh = jnp.dot(ffh.astype(jnp.bfloat16), wff2_ref[l],
                  preferred_element_type=jnp.float32) + bw2
    return _layernorm(ffh + residual, g3, be3)


def decoder_kernel(x_ref, enc_ref, bias_ref, blkmask_ref, wmain_ref, wff2_ref,
                   vecs_ref, o_ref, *, num_layers):
    x = x_ref[...]                                   # (N, D) f32
    enc_bf = enc_ref[...].astype(jnp.bfloat16)       # reused by every layer
    self_bias = bias_ref[0]                          # (N, H*N) f32
    cross_bias = bias_ref[1]                         # (N, H*N) f32
    blkmask = blkmask_ref[...]                       # (H*N, D) f32 0/1

    # Static unroll: NUM_LAYERS == 2 keeps vreg pressure low (see TODO above).
    for l in range(num_layers):
        x = _decoder_layer(l, x, enc_bf, wmain_ref, wff2_ref, vecs_ref,
                           self_bias, cross_bias, blkmask)

    o_ref[...] = x


# ----------------------------- wrapper --------------------------------------
def _pack_params(all_params):
    """Stack per-layer weights on a leading layer axis; pack bias/LN vectors.

    Returns:
      wmain: (L, D, 10D) bf16  [wqkv1(3D) | wo1(D) | wqk2(2D) | wv2(D) |
                                wo2(D) | w1(D_FF)]
      wff2 : (L, D_FF, D) bf16
      vecs : (L, 13, 3D)  f32
    The 1/sqrt(d_head) score scale is folded into the Q columns here.
    """
    scale = 1.0 / (D_HEAD ** 0.5)
    wmain_l, wff2_l, vecs_l = [], [], []
    for p in all_params:
        (wq1, bq1, wk1, bk1, wv1, bv1, wo1, bo1, g1, be1,
         wq2, bq2, wk2, bk2, wv2, bv2, wo2, bo2, g2, be2,
         w1, bw1, w2, bw2, g3, be3) = p
        wqkv1 = jnp.concatenate([wq1 * scale, wk1, wv1], axis=1)   # (D, 3D)
        bqkv1 = jnp.concatenate([bq1 * scale, bk1, bv1], axis=1)   # (1, 3D)
        wqk2 = jnp.concatenate([wq2 * scale, wk2], axis=1)         # (D, 2D)
        bqk2 = jnp.concatenate([bq2 * scale, bk2], axis=1)         # (1, 2D)

        wmain = jnp.concatenate([wqkv1, wo1, wqk2, wv2, wo2, w1], axis=1)
        wmain_l.append(wmain.astype(jnp.bfloat16))                 # (D, 10D)
        wff2_l.append(w2.astype(jnp.bfloat16))                     # (D_FF, D)

        rows = [bqkv1, bo1, g1, be1, bqk2, bv2, bo2, g2, be2,
                bw1, bw2, g3, be3]
        vecs_l.append(jnp.concatenate(
            [jnp.pad(r, ((0, 0), (0, _VEC_W - r.shape[1]))) for r in rows],
            axis=0).astype(jnp.float32))                           # (13, 3D)
    return jnp.stack(wmain_l), jnp.stack(wff2_l), jnp.stack(vecs_l)


def decoder_forward(x, encoder_output, all_params):
    B, S, D = x.shape
    n = B * S
    num_layers = len(all_params)

    # Flatten batch*seq into rows (done in XLA; kernel never reshapes).
    x2 = x.reshape(n, D)
    enc2 = encoder_output.reshape(n, D)

    # Block-diagonal (per-batch) additive attention masks, built once here,
    # tiled head-wide (N, H*N) so the kernel's all-heads score matmul can add
    # them directly.  (Masks/bias stay f32 — never bf16.)
    row = jnp.arange(n)[:, None]
    col = jnp.arange(n)[None, :]
    same_batch = (row // S) == (col // S)
    self_bias = jnp.where(same_batch & (row >= col), 0.0, NEG_INF
                          ).astype(jnp.float32)
    cross_bias = jnp.where(same_batch, 0.0, NEG_INF).astype(jnp.float32)
    biases = jnp.stack([jnp.tile(self_bias, (1, NUM_HEADS)),
                        jnp.tile(cross_bias, (1, NUM_HEADS))])   # (2, N, H*N)

    # 0/1 block-diagonal head mask used by the head-batched attention trick.
    r = jnp.arange(NUM_HEADS * n)[:, None]
    c = jnp.arange(D)[None, :]
    blkmask = ((r // n) == (c // D_HEAD)).astype(jnp.float32)    # (H*N, D)

    wmain, wff2, vecs = _pack_params(all_params)

    out = pl.pallas_call(
        functools.partial(decoder_kernel, num_layers=num_layers),
        out_shape=jax.ShapeDtypeStruct((n, D), jnp.float32),
        # no grid / no BlockSpecs: whole arrays are single VMEM-resident
        # blocks (everything together is well under 1 MiB on every TPU gen).
    )(x2, enc2, biases, blkmask, wmain, wff2, vecs)
    return out.reshape(B, S, D)


# ----------------------------- params --------------------------------------
def init_layer_params(key):
    ks = iter(jax.random.split(key, 26))

    def w(shape):
        return (0.1 * jax.random.normal(next(ks), shape)).astype(jnp.float32)

    def b(width):
        return (0.1 * jax.random.normal(next(ks), (1, width))).astype(jnp.float32)

    def g(width):
        return (1.0 + 0.1 * jax.random.normal(next(ks), (1, width))
                ).astype(jnp.float32)

    params = [
        # masked self-attention
        w((D_MODEL, D_MODEL)), b(D_MODEL),
        w((D_MODEL, D_MODEL)), b(D_MODEL),
        w((D_MODEL, D_MODEL)), b(D_MODEL),
        w((D_MODEL, D_MODEL)), b(D_MODEL),
        # ln1
        g(D_MODEL), b(D_MODEL),
        # cross attention
        w((D_MODEL, D_MODEL)), b(D_MODEL),
        w((D_MODEL, D_MODEL)), b(D_MODEL),
        w((D_MODEL, D_MODEL)), b(D_MODEL),
        w((D_MODEL, D_MODEL)), b(D_MODEL),
        # ln2
        g(D_MODEL), b(D_MODEL),
        # feed forward
        w((D_MODEL, D_FF)), b(D_FF),
        w((D_FF, D_MODEL)), b(D_MODEL),
        # ln3
        g(D_MODEL), b(D_MODEL),
    ]
    assert len(params) == N_RAW_PARAMS_PER_LAYER
    return params


# ----------------------------- pure-JAX reference ---------------------------
def _ref_mha(q_in, k_in, v_in, wq, bq, wk, bk, wv, bv, wo, bo, causal):
    B, S, D = q_in.shape
    Q = q_in @ wq + bq
    K = k_in @ wk + bk
    V = v_in @ wv + bv
    Qh = Q.reshape(B, S, NUM_HEADS, D_HEAD).transpose(0, 2, 1, 3)
    Kh = K.reshape(B, S, NUM_HEADS, D_HEAD).transpose(0, 2, 1, 3)
    Vh = V.reshape(B, S, NUM_HEADS, D_HEAD).transpose(0, 2, 1, 3)
    sc = jnp.einsum("bhqd,bhkd->bhqk", Qh, Kh) / (D_HEAD ** 0.5)
    if causal:
        row = jnp.arange(S)[:, None]
        col = jnp.arange(S)[None, :]
        sc = jnp.where(row >= col, sc, NEG_INF)
    attn = jax.nn.softmax(sc, axis=-1)
    o = jnp.einsum("bhqk,bhkd->bhqd", attn, Vh)
    o = o.transpose(0, 2, 1, 3).reshape(B, S, D)
    return o @ wo + bo


def _ref_ln(v, g, b):
    mu = jnp.mean(v, axis=-1, keepdims=True)
    var = jnp.mean((v - mu) ** 2, axis=-1, keepdims=True)
    return (v - mu) / jnp.sqrt(var + EPSILON) * g + b


def _ref_layer(x, enc, p):
    (wq1, bq1, wk1, bk1, wv1, bv1, wo1, bo1, g1, be1,
     wq2, bq2, wk2, bk2, wv2, bv2, wo2, bo2, g2, be2,
     w1, bw1, w2, bw2, g3, be3) = p
    r = x
    h = _ref_mha(x, x, x, wq1, bq1, wk1, bk1, wv1, bv1, wo1, bo1, True)
    h = _ref_ln(h + r, g1, be1)
    r = h
    h2 = _ref_mha(enc, enc, h, wq2, bq2, wk2, bk2, wv2, bv2, wo2, bo2, False)
    h = _ref_ln(h2 + r, g2, be2)
    r = h
    ffh = jnp.maximum(h @ w1 + bw1, 0.0) @ w2 + bw2
    return _ref_ln(ffh + r, g3, be3)


def ref_forward(x, enc, all_params):
    for p in all_params:
        x = _ref_layer(x, enc, p)
    return x


# ----------------------------- main -----------------------------------------
if __name__ == "__main__":
    key = jax.random.PRNGKey(0)
    kx, kenc, kp = jax.random.split(key, 3)

    x = jax.random.normal(kx, (BATCH, SEQ, D_MODEL), jnp.float32)
    encoder_output = jax.random.normal(kenc, (BATCH, SEQ, D_MODEL), jnp.float32)

    layer_keys = jax.random.split(kp, NUM_LAYERS)
    all_params = [init_layer_params(k) for k in layer_keys]

    decoder_jit = jax.jit(decoder_forward)
    out = jax.block_until_ready(decoder_jit(x, encoder_output, all_params))

    ref = jax.block_until_ready(ref_forward(x, encoder_output, all_params))
    assert out.shape == (BATCH, SEQ, D_MODEL)
    # tolerance accounts for bf16 MXU operands in the kernel vs. the f32
    # reference (all accumulation / softmax / LayerNorm stay f32); genuine
    # bugs produce O(1) errors on these post-LN unit-scale activations.
    max_err = float(jnp.max(jnp.abs(out - ref)))
    assert jnp.allclose(out, ref, atol=5e-2, rtol=5e-2), max_err

    print("KERNEL_OK")
</pallas_src>

<mosaic_0001>
module attributes {stable_mosaic.version = 11 : i64} {
  func.func @decoder_kernel(%arg0: memref<16x32xf32, #tpu.memory_space<vmem>>, %arg1: memref<16x32xf32, #tpu.memory_space<vmem>>, %arg2: memref<2x16x64xf32, #tpu.memory_space<vmem>>, %arg3: memref<64x32xf32, #tpu.memory_space<vmem>>, %arg4: memref<2x32x320xbf16, #tpu.memory_space<vmem>>, %arg5: memref<2x64x32xbf16, #tpu.memory_space<vmem>>, %arg6: memref<2x13x96xf32, #tpu.memory_space<vmem>>, %arg7: memref<16x32xf32, #tpu.memory_space<vmem>>) attributes {dimension_semantics = [], scalar_prefetch = 0 : i64, scratch_operands = 0 : i64, tpu.core_type = #tpu.core_type<tc>} {
    %c0 = arith.constant 0 : index
    %c0_0 = arith.constant 0 : index
    %0 = vector.load %arg0[%c0, %c0_0] : memref<16x32xf32, #tpu.memory_space<vmem>>, vector<16x32xf32>
    %c0_1 = arith.constant 0 : index
    %c0_2 = arith.constant 0 : index
    %1 = vector.load %arg1[%c0_1, %c0_2] : memref<16x32xf32, #tpu.memory_space<vmem>>, vector<16x32xf32>
    %2 = arith.truncf %1 : vector<16x32xf32> to vector<16x32xbf16>
    %c0_3 = arith.constant 0 : index
    %c0_4 = arith.constant 0 : index
    %c0_5 = arith.constant 0 : index
    %3 = vector.load %arg2[%c0_3, %c0_4, %c0_5] : memref<2x16x64xf32, #tpu.memory_space<vmem>>, vector<1x16x64xf32>
    %4 = vector.shape_cast %3 : vector<1x16x64xf32> to vector<16x64xf32>
    %c1 = arith.constant 1 : index
    %c0_6 = arith.constant 0 : index
    %c0_7 = arith.constant 0 : index
    %5 = vector.load %arg2[%c1, %c0_6, %c0_7] : memref<2x16x64xf32, #tpu.memory_space<vmem>>, vector<1x16x64xf32>
    %6 = vector.shape_cast %5 : vector<1x16x64xf32> to vector<16x64xf32>
    %c0_8 = arith.constant 0 : index
    %c0_9 = arith.constant 0 : index
    %7 = vector.load %arg3[%c0_8, %c0_9] : memref<64x32xf32, #tpu.memory_space<vmem>>, vector<64x32xf32>
    %c0_10 = arith.constant 0 : index
    %c0_11 = arith.constant 0 : index
    %c0_12 = arith.constant 0 : index
    %8 = vector.load %arg6[%c0_10, %c0_11, %c0_12] : memref<2x13x96xf32, #tpu.memory_space<vmem>>, vector<1x13x96xf32>
    %9 = vector.shape_cast %8 : vector<1x13x96xf32> to vector<13x96xf32>
    %10 = vector.extract_strided_slice %9 {offsets = [0, 0], sizes = [1, 96], strides = [1, 1]} : vector<13x96xf32> to vector<1x96xf32>
    %11 = vector.extract_strided_slice %9 {offsets = [1, 0], sizes = [1, 32], strides = [1, 1]} : vector<13x96xf32> to vector<1x32xf32>
    %12 = vector.extract_strided_slice %9 {offsets = [2, 0], sizes = [1, 32], strides = [1, 1]} : vector<13x96xf32> to vector<1x32xf32>
    %13 = vector.extract_strided_slice %9 {offsets = [3, 0], sizes = [1, 32], strides = [1, 1]} : vector<13x96xf32> to vector<1x32xf32>
    %14 = vector.extract_strided_slice %9 {offsets = [4, 0], sizes = [1, 64], strides = [1, 1]} : vector<13x96xf32> to vector<1x64xf32>
    %15 = vector.extract_strided_slice %9 {offsets = [5, 0], sizes = [1, 32], strides = [1, 1]} : vector<13x96xf32> to vector<1x32xf32>
    %16 = vector.extract_strided_slice %9 {offsets = [6, 0], sizes = [1, 32], strides = [1, 1]} : vector<13x96xf32> to vector<1x32xf32>
    %17 = vector.extract_strided_slice %9 {offsets = [7, 0], sizes = [1, 32], strides = [1, 1]} : vector<13x96xf32> to vector<1x32xf32>
    %18 = vector.extract_strided_slice %9 {offsets = [8, 0], sizes = [1, 32], strides = [1, 1]} : vector<13x96xf32> to vector<1x32xf32>
    %19 = vector.extract_strided_slice %9 {offsets = [9, 0], sizes = [1, 64], strides = [1, 1]} : vector<13x96xf32> to vector<1x64xf32>
    %20 = vector.extract_strided_slice %9 {offsets = [10, 0], sizes = [1, 32], strides = [1, 1]} : vector<13x96xf32> to vector<1x32xf32>
    %21 = vector.extract_strided_slice %9 {offsets = [11, 0], sizes = [1, 32], strides = [1, 1]} : vector<13x96xf32> to vector<1x32xf32>
    %22 = vector.extract_strided_slice %9 {offsets = [12, 0], sizes = [1, 32], strides = [1, 1]} : vector<13x96xf32> to vector<1x32xf32>
    %23 = arith.truncf %0 : vector<16x32xf32> to vector<16x32xbf16>
    %c0_13 = arith.constant 0 : index
    %c0_14 = arith.constant 0 : index
    %c0_15 = arith.constant 0 : index
    %24 = vector.load %arg4[%c0_13, %c0_14, %c0_15] : memref<2x32x320xbf16, #tpu.memory_space<vmem>>, vector<1x32x96xbf16>
    %25 = vector.shape_cast %24 : vector<1x32x96xbf16> to vector<32x96xbf16>
    %cst = arith.constant dense<0.000000e+00> : vector<16x96xf32>
    %26 = tpu.matmul %23, %25, %cst {dimension_numbers = #tpu.dot_dimension_numbers<[1], [0], [0], [1], [0, 0, 1, 1], [], []>} : vector<16x32xbf16>, vector<32x96xbf16>, vector<16x96xf32> -> vector<16x96xf32>
    %27 = vector.broadcast %10 : vector<1x96xf32> to vector<16x96xf32>
    %28 = arith.addf %26, %27 : vector<16x96xf32>
    %29 = vector.extract_strided_slice %28 {offsets = [0, 0], sizes = [16, 32], strides = [1, 1]} : vector<16x96xf32> to vector<16x32xf32>
    %30 = vector.extract_strided_slice %28 {offsets = [0, 32], sizes = [16, 32], strides = [1, 1]} : vector<16x96xf32> to vector<16x32xf32>
    %31 = vector.extract_strided_slice %28 {offsets = [0, 64], sizes = [16, 32], strides = [1, 1]} : vector<16x96xf32> to vector<16x32xf32>
    %c0_16 = arith.constant 0 : index
    %c0_17 = arith.constant 0 : index
    %c96 = arith.constant 96 : index
    %32 = vector.load %arg4[%c0_16, %c0_17, %c96] : memref<2x32x320xbf16, #tpu.memory_space<vmem>>, vector<1x32x32xbf16>
    %33 = vector.shape_cast %32 : vector<1x32x32xbf16> to vector<32x32xbf16>
    %34 = tpu.concatenate %30, %30, %30, %30 in 0 : vector<16x32xf32>, vector<16x32xf32>, vector<16x32xf32>, vector<16x32xf32> -> vector<64x32xf32>
    %35 = arith.mulf %34, %7 : vector<64x32xf32>
    %36 = tpu.concatenate %31, %31, %31, %31 in 0 : vector<16x32xf32>, vector<16x32xf32>, vector<16x32xf32>, vector<16x32xf32> -> vector<64x32xf32>
    %37 = arith.mulf %36, %7 : vector<64x32xf32>
    %38 = arith.truncf %29 : vector<16x32xf32> to vector<16x32xbf16>
    %39 = arith.truncf %35 : vector<64x32xf32> to vector<64x32xbf16>
    %cst_18 = arith.constant dense<0.000000e+00> : vector<16x64xf32>
    %40 = tpu.matmul %38, %39, %cst_18 {dimension_numbers = #tpu.dot_dimension_numbers<[1], [1], [0], [0], [0, 0, 1, 0], [], []>} : vector<16x32xbf16>, vector<64x32xbf16>, vector<16x64xf32> -> vector<16x64xf32>
    %41 = arith.addf %40, %4 : vector<16x64xf32>
    %cst_19 = arith.constant dense<0xFF800000> : vector<16xf32>
    %42 = vector.multi_reduction <maximumf>, %41, %cst_19 [1] : vector<16x64xf32> to vector<16xf32>
    %43 = vector.shape_cast %42 : vector<16xf32> to vector<16x1xf32>
    %44 = vector.broadcast %43 : vector<16x1xf32> to vector<16x64xf32>
    %45 = arith.subf %41, %44 : vector<16x64xf32>
    %46 = math.exp %45 : vector<16x64xf32>
    %47 = tpu.concatenate %37, %7 in 1 : vector<64x32xf32>, vector<64x32xf32> -> vector<64x64xf32>
    %48 = arith.truncf %47 : vector<64x64xf32> to vector<64x64xbf16>
    %49 = arith.truncf %46 : vector<16x64xf32> to vector<16x64xbf16>
    %cst_20 = arith.constant dense<0.000000e+00> : vector<16x64xf32>
    %50 = tpu.matmul %49, %48, %cst_20 {dimension_numbers = #tpu.dot_dimension_numbers<[1], [0], [0], [1], [0, 0, 1, 1], [], []>} : vector<16x64xbf16>, vector<64x64xbf16>, vector<16x64xf32> -> vector<16x64xf32>
    %51 = vector.extract_strided_slice %50 {offsets = [0, 0], sizes = [16, 32], strides = [1, 1]} : vector<16x64xf32> to vector<16x32xf32>
    %52 = vector.extract_strided_slice %50 {offsets = [0, 32], sizes = [16, 32], strides = [1, 1]} : vector<16x64xf32> to vector<16x32xf32>
    %53 = arith.divf %51, %52 : vector<16x32xf32>
    %54 = arith.truncf %53 : vector<16x32xf32> to vector<16x32xbf16>
    %cst_21 = arith.constant dense<0.000000e+00> : vector<16x32xf32>
    %55 = tpu.matmul %54, %33, %cst_21 {dimension_numbers = #tpu.dot_dimension_numbers<[1], [0], [0], [1], [0, 0, 1, 1], [], []>} : vector<16x32xbf16>, vector<32x32xbf16>, vector<16x32xf32> -> vector<16x32xf32>
    %56 = vector.broadcast %11 : vector<1x32xf32> to vector<16x32xf32>
    %57 = arith.addf %55, %56 : vector<16x32xf32>
    %58 = arith.addf %57, %0 : vector<16x32xf32>
    %cst_22 = arith.constant dense<0.000000e+00> : vector<16xf32>
    %59 = vector.multi_reduction <add>, %58, %cst_22 [1] : vector<16x32xf32> to vector<16xf32>
    %60 = vector.shape_cast %59 : vector<16xf32> to vector<16x1xf32>
    %cst_23 = arith.constant 3.200000e+01 : f32
    %61 = vector.broadcast %cst_23 : f32 to vector<16x1xf32>
    %62 = arith.divf %60, %61 : vector<16x1xf32>
    %63 = vector.broadcast %62 : vector<16x1xf32> to vector<16x32xf32>
    %64 = arith.subf %58, %63 : vector<16x32xf32>
    %65 = arith.mulf %64, %64 : vector<16x32xf32>
    %cst_24 = arith.constant dense<0.000000e+00> : vector<16xf32>
    %66 = vector.multi_reduction <add>, %65, %cst_24 [1] : vector<16x32xf32> to vector<16xf32>
    %67 = vector.shape_cast %66 : vector<16xf32> to vector<16x1xf32>
    %cst_25 = arith.constant 3.200000e+01 : f32
    %68 = vector.broadcast %cst_25 : f32 to vector<16x1xf32>
    %69 = arith.divf %67, %68 : vector<16x1xf32>
    %70 = vector.broadcast %62 : vector<16x1xf32> to vector<16x32xf32>
    %71 = arith.subf %58, %70 : vector<16x32xf32>
    %cst_26 = arith.constant 9.99999997E-7 : f32
    %72 = vector.broadcast %cst_26 : f32 to vector<16x1xf32>
    %73 = arith.addf %69, %72 : vector<16x1xf32>
    %74 = math.rsqrt %73 : vector<16x1xf32>
    %75 = vector.broadcast %74 : vector<16x1xf32> to vector<16x32xf32>
    %76 = arith.mulf %71, %75 : vector<16x32xf32>
    %77 = vector.broadcast %12 : vector<1x32xf32> to vector<16x32xf32>
    %78 = arith.mulf %76, %77 : vector<16x32xf32>
    %79 = vector.broadcast %13 : vector<1x32xf32> to vector<16x32xf32>
    %80 = arith.addf %78, %79 : vector<16x32xf32>
    %c0_27 = arith.constant 0 : index
    %c0_28 = arith.constant 0 : index
    %c128 = arith.constant 128 : index
    %81 = vector.load %arg4[%c0_27, %c0_28, %c128] : memref<2x32x320xbf16, #tpu.memory_space<vmem>>, vector<1x32x64xbf16>
    %82 = vector.shape_cast %81 : vector<1x32x64xbf16> to vector<32x64xbf16>
    %cst_29 = arith.constant dense<0.000000e+00> : vector<16x64xf32>
    %83 = tpu.matmul %2, %82, %cst_29 {dimension_numbers = #tpu.dot_dimension_numbers<[1], [0], [0], [1], [0, 0, 1, 1], [], []>} : vector<16x32xbf16>, vector<32x64xbf16>, vector<16x64xf32> -> vector<16x64xf32>
    %84 = vector.broadcast %14 : vector<1x64xf32> to vector<16x64xf32>
    %85 = arith.addf %83, %84 : vector<16x64xf32>
    %86 = arith.truncf %80 : vector<16x32xf32> to vector<16x32xbf16>
    %c0_30 = arith.constant 0 : index
    %c0_31 = arith.constant 0 : index
    %c192 = arith.constant 192 : index
    %87 = vector.load %arg4[%c0_30, %c0_31, %c192] : memref<2x32x320xbf16, #tpu.memory_space<vmem>>, vector<1x32x32xbf16>
    %88 = vector.shape_cast %87 : vector<1x32x32xbf16> to vector<32x32xbf16>
    %cst_32 = arith.constant dense<0.000000e+00> : vector<16x32xf32>
    %89 = tpu.matmul %86, %88, %cst_32 {dimension_numbers = #tpu.dot_dimension_numbers<[1], [0], [0], [1], [0, 0, 1, 1], [], []>} : vector<16x32xbf16>, vector<32x32xbf16>, vector<16x32xf32> -> vector<16x32xf32>
    %90 = vector.broadcast %15 : vector<1x32xf32> to vector<16x32xf32>
    %91 = arith.addf %89, %90 : vector<16x32xf32>
    %92 = vector.extract_strided_slice %85 {offsets = [0, 0], sizes = [16, 32], strides = [1, 1]} : vector<16x64xf32> to vector<16x32xf32>
    %93 = vector.extract_strided_slice %85 {offsets = [0, 32], sizes = [16, 32], strides = [1, 1]} : vector<16x64xf32> to vector<16x32xf32>
    %c0_33 = arith.constant 0 : index
    %c0_34 = arith.constant 0 : index
    %c224 = arith.constant 224 : index
    %94 = vector.load %arg4[%c0_33, %c0_34, %c224] : memref<2x32x320xbf16, #tpu.memory_space<vmem>>, vector<1x32x32xbf16>
    %95 = vector.shape_cast %94 : vector<1x32x32xbf16> to vector<32x32xbf16>
    %96 = tpu.concatenate %93, %93, %93, %93 in 0 : vector<16x32xf32>, vector<16x32xf32>, vector<16x32xf32>, vector<16x32xf32> -> vector<64x32xf32>
    %97 = arith.mulf %96, %7 : vector<64x32xf32>
    %98 = tpu.concatenate %91, %91, %91, %91 in 0 : vector<16x32xf32>, vector<16x32xf32>, vector<16x32xf32>, vector<16x32xf32> -> vector<64x32xf32>
    %99 = arith.mulf %98, %7 : vector<64x32xf32>
    %100 = arith.truncf %92 : vector<16x32xf32> to vector<16x32xbf16>
    %101 = arith.truncf %97 : vector<64x32xf32> to vector<64x32xbf16>
    %cst_35 = arith.constant dense<0.000000e+00> : vector<16x64xf32>
    %102 = tpu.matmul %100, %101, %cst_35 {dimension_numbers = #tpu.dot_dimension_numbers<[1], [1], [0], [0], [0, 0, 1, 0], [], []>} : vector<16x32xbf16>, vector<64x32xbf16>, vector<16x64xf32> -> vector<16x64xf32>
    %103 = arith.addf %102, %6 : vector<16x64xf32>
    %cst_36 = arith.constant dense<0xFF800000> : vector<16xf32>
    %104 = vector.multi_reduction <maximumf>, %103, %cst_36 [1] : vector<16x64xf32> to vector<16xf32>
    %105 = vector.shape_cast %104 : vector<16xf32> to vector<16x1xf32>
    %106 = vector.broadcast %105 : vector<16x1xf32> to vector<16x64xf32>
    %107 = arith.subf %103, %106 : vector<16x64xf32>
    %108 = math.exp %107 : vector<16x64xf32>
    %109 = tpu.concatenate %99, %7 in 1 : vector<64x32xf32>, vector<64x32xf32> -> vector<64x64xf32>
    %110 = arith.truncf %109 : vector<64x64xf32> to vector<64x64xbf16>
    %111 = arith.truncf %108 : vector<16x64xf32> to vector<16x64xbf16>
    %cst_37 = arith.constant dense<0.000000e+00> : vector<16x64xf32>
    %112 = tpu.matmul %111, %110, %cst_37 {dimension_numbers = #tpu.dot_dimension_numbers<[1], [0], [0], [1], [0, 0, 1, 1], [], []>} : vector<16x64xbf16>, vector<64x64xbf16>, vector<16x64xf32> -> vector<16x64xf32>
    %113 = vector.extract_strided_slice %112 {offsets = [0, 0], sizes = [16, 32], strides = [1, 1]} : vector<16x64xf32> to vector<16x32xf32>
    %114 = vector.extract_strided_slice %112 {offsets = [0, 32], sizes = [16, 32], strides = [1, 1]} : vector<16x64xf32> to vector<16x32xf32>
    %115 = arith.divf %113, %114 : vector<16x32xf32>
    %116 = arith.truncf %115 : vector<16x32xf32> to vector<16x32xbf16>
    %cst_38 = arith.constant dense<0.000000e+00> : vector<16x32xf32>
    %117 = tpu.matmul %116, %95, %cst_38 {dimension_numbers = #tpu.dot_dimension_numbers<[1], [0], [0], [1], [0, 0, 1, 1], [], []>} : vector<16x32xbf16>, vector<32x32xbf16>, vector<16x32xf32> -> vector<16x32xf32>
    %118 = vector.broadcast %16 : vector<1x32xf32> to vector<16x32xf32>
    %119 = arith.addf %117, %118 : vector<16x32xf32>
    %120 = arith.addf %119, %80 : vector<16x32xf32>
    %cst_39 = arith.constant dense<0.000000e+00> : vector<16xf32>
    %121 = vector.multi_reduction <add>, %120, %cst_39 [1] : vector<16x32xf32> to vector<16xf32>
    %122 = vector.shape_cast %121 : vector<16xf32> to vector<16x1xf32>
    %cst_40 = arith.constant 3.200000e+01 : f32
    %123 = vector.broadcast %cst_40 : f32 to vector<16x1xf32>
    %124 = arith.divf %122, %123 : vector<16x1xf32>
    %125 = vector.broadcast %124 : vector<16x1xf32> to vector<16x32xf32>
    %126 = arith.subf %120, %125 : vector<16x32xf32>
    %127 = arith.mulf %126, %126 : vector<16x32xf32>
    %cst_41 = arith.constant dense<0.000000e+00> : vector<16xf32>
    %128 = vector.multi_reduction <add>, %127, %cst_41 [1] : vector<16x32xf32> to vector<16xf32>
    %129 = vector.shape_cast %128 : vector<16xf32> to vector<16x1xf32>
    %cst_42 = arith.constant 3.200000e+01 : f32
    %130 = vector.broadcast %cst_42 : f32 to vector<16x1xf32>
    %131 = arith.divf %129, %130 : vector<16x1xf32>
    %132 = vector.broadcast %124 : vector<16x1xf32> to vector<16x32xf32>
    %133 = arith.subf %120, %132 : vector<16x32xf32>
    %cst_43 = arith.constant 9.99999997E-7 : f32
    %134 = vector.broadcast %cst_43 : f32 to vector<16x1xf32>
    %135 = arith.addf %131, %134 : vector<16x1xf32>
    %136 = math.rsqrt %135 : vector<16x1xf32>
    %137 = vector.broadcast %136 : vector<16x1xf32> to vector<16x32xf32>
    %138 = arith.mulf %133, %137 : vector<16x32xf32>
    %139 = vector.broadcast %17 : vector<1x32xf32> to vector<16x32xf32>
    %140 = arith.mulf %138, %139 : vector<16x32xf32>
    %141 = vector.broadcast %18 : vector<1x32xf32> to vector<16x32xf32>
    %142 = arith.addf %140, %141 : vector<16x32xf32>
    %143 = arith.truncf %142 : vector<16x32xf32> to vector<16x32xbf16>
    %c0_44 = arith.constant 0 : index
    %c0_45 = arith.constant 0 : index
    %c256 = arith.constant 256 : index
    %144 = vector.load %arg4[%c0_44, %c0_45, %c256] : memref<2x32x320xbf16, #tpu.memory_space<vmem>>, vector<1x32x64xbf16>
    %145 = vector.shape_cast %144 : vector<1x32x64xbf16> to vector<32x64xbf16>
    %cst_46 = arith.constant dense<0.000000e+00> : vector<16x64xf32>
    %146 = tpu.matmul %143, %145, %cst_46 {dimension_numbers = #tpu.dot_dimension_numbers<[1], [0], [0], [1], [0, 0, 1, 1], [], []>} : vector<16x32xbf16>, vector<32x64xbf16>, vector<16x64xf32> -> vector<16x64xf32>
    %147 = vector.broadcast %19 : vector<1x64xf32> to vector<16x64xf32>
    %148 = arith.addf %146, %147 : vector<16x64xf32>
    %cst_47 = arith.constant 0.000000e+00 : f32
    %149 = vector.broadcast %cst_47 : f32 to vector<16x64xf32>
    %150 = arith.maximumf %148, %149 : vector<16x64xf32>
    %151 = arith.truncf %150 : vector<16x64xf32> to vector<16x64xbf16>
    %c0_48 = arith.constant 0 : index
    %c0_49 = arith.constant 0 : index
    %c0_50 = arith.constant 0 : index
    %152 = vector.load %arg5[%c0_48, %c0_49, %c0_50] : memref<2x64x32xbf16, #tpu.memory_space<vmem>>, vector<1x64x32xbf16>
    %153 = vector.shape_cast %152 : vector<1x64x32xbf16> to vector<64x32xbf16>
    %cst_51 = arith.constant dense<0.000000e+00> : vector<16x32xf32>
    %154 = tpu.matmul %151, %153, %cst_51 {dimension_numbers = #tpu.dot_dimension_numbers<[1], [0], [0], [1], [0, 0, 1, 1], [], []>} : vector<16x64xbf16>, vector<64x32xbf16>, vector<16x32xf32> -> vector<16x32xf32>
    %155 = vector.broadcast %20 : vector<1x32xf32> to vector<16x32xf32>
    %156 = arith.addf %154, %155 : vector<16x32xf32>
    %157 = arith.addf %156, %142 : vector<16x32xf32>
    %cst_52 = arith.constant dense<0.000000e+00> : vector<16xf32>
    %158 = vector.multi_reduction <add>, %157, %cst_52 [1] : vector<16x32xf32> to vector<16xf32>
    %159 = vector.shape_cast %158 : vector<16xf32> to vector<16x1xf32>
    %cst_53 = arith.constant 3.200000e+01 : f32
    %160 = vector.broadcast %cst_53 : f32 to vector<16x1xf32>
    %161 = arith.divf %159, %160 : vector<16x1xf32>
    %162 = vector.broadcast %161 : vector<16x1xf32> to vector<16x32xf32>
    %163 = arith.subf %157, %162 : vector<16x32xf32>
    %164 = arith.mulf %163, %163 : vector<16x32xf32>
    %cst_54 = arith.constant dense<0.000000e+00> : vector<16xf32>
    %165 = vector.multi_reduction <add>, %164, %cst_54 [1] : vector<16x32xf32> to vector<16xf32>
    %166 = vector.shape_cast %165 : vector<16xf32> to vector<16x1xf32>
    %cst_55 = arith.constant 3.200000e+01 : f32
    %167 = vector.broadcast %cst_55 : f32 to vector<16x1xf32>
    %168 = arith.divf %166, %167 : vector<16x1xf32>
    %169 = vector.broadcast %161 : vector<16x1xf32> to vector<16x32xf32>
    %170 = arith.subf %157, %169 : vector<16x32xf32>
    %cst_56 = arith.constant 9.99999997E-7 : f32
    %171 = vector.broadcast %cst_56 : f32 to vector<16x1xf32>
    %172 = arith.addf %168, %171 : vector<16x1xf32>
    %173 = math.rsqrt %172 : vector<16x1xf32>
    %174 = vector.broadcast %173 : vector<16x1xf32> to vector<16x32xf32>
    %175 = arith.mulf %170, %174 : vector<16x32xf32>
    %176 = vector.broadcast %21 : vector<1x32xf32> to vector<16x32xf32>
    %177 = arith.mulf %175, %176 : vector<16x32xf32>
    %178 = vector.broadcast %22 : vector<1x32xf32> to vector<16x32xf32>
    %179 = arith.addf %177, %178 : vector<16x32xf32>
    %c1_57 = arith.constant 1 : index
    %c0_58 = arith.constant 0 : index
    %c0_59 = arith.constant 0 : index
    %180 = vector.load %arg6[%c1_57, %c0_58, %c0_59] : memref<2x13x96xf32, #tpu.memory_space<vmem>>, vector<1x13x96xf32>
    %181 = vector.shape_cast %180 : vector<1x13x96xf32> to vector<13x96xf32>
    %182 = vector.extract_strided_slice %181 {offsets = [0, 0], sizes = [1, 96], strides = [1, 1]} : vector<13x96xf32> to vector<1x96xf32>
    %183 = vector.extract_strided_slice %181 {offsets = [1, 0], sizes = [1, 32], strides = [1, 1]} : vector<13x96xf32> to vector<1x32xf32>
    %184 = vector.extract_strided_slice %181 {offsets = [2, 0], sizes = [1, 32], strides = [1, 1]} : vector<13x96xf32> to vector<1x32xf32>
    %185 = vector.extract_strided_slice %181 {offsets = [3, 0], sizes = [1, 32], strides = [1, 1]} : vector<13x96xf32> to vector<1x32xf32>
    %186 = vector.extract_strided_slice %181 {offsets = [4, 0], sizes = [1, 64], strides = [1, 1]} : vector<13x96xf32> to vector<1x64xf32>
    %187 = vector.extract_strided_slice %181 {offsets = [5, 0], sizes = [1, 32], strides = [1, 1]} : vector<13x96xf32> to vector<1x32xf32>
    %188 = vector.extract_strided_slice %181 {offsets = [6, 0], sizes = [1, 32], strides = [1, 1]} : vector<13x96xf32> to vector<1x32xf32>
    %189 = vector.extract_strided_slice %181 {offsets = [7, 0], sizes = [1, 32], strides = [1, 1]} : vector<13x96xf32> to vector<1x32xf32>
    %190 = vector.extract_strided_slice %181 {offsets = [8, 0], sizes = [1, 32], strides = [1, 1]} : vector<13x96xf32> to vector<1x32xf32>
    %191 = vector.extract_strided_slice %181 {offsets = [9, 0], sizes = [1, 64], strides = [1, 1]} : vector<13x96xf32> to vector<1x64xf32>
    %192 = vector.extract_strided_slice %181 {offsets = [10, 0], sizes = [1, 32], strides = [1, 1]} : vector<13x96xf32> to vector<1x32xf32>
    %193 = vector.extract_strided_slice %181 {offsets = [11, 0], sizes = [1, 32], strides = [1, 1]} : vector<13x96xf32> to vector<1x32xf32>
    %194 = vector.extract_strided_slice %181 {offsets = [12, 0], sizes = [1, 32], strides = [1, 1]} : vector<13x96xf32> to vector<1x32xf32>
    %195 = arith.truncf %179 : vector<16x32xf32> to vector<16x32xbf16>
    %c1_60 = arith.constant 1 : index
    %c0_61 = arith.constant 0 : index
    %c0_62 = arith.constant 0 : index
    %196 = vector.load %arg4[%c1_60, %c0_61, %c0_62] : memref<2x32x320xbf16, #tpu.memory_space<vmem>>, vector<1x32x96xbf16>
    %197 = vector.shape_cast %196 : vector<1x32x96xbf16> to vector<32x96xbf16>
    %cst_63 = arith.constant dense<0.000000e+00> : vector<16x96xf32>
    %198 = tpu.matmul %195, %197, %cst_63 {dimension_numbers = #tpu.dot_dimension_numbers<[1], [0], [0], [1], [0, 0, 1, 1], [], []>} : vector<16x32xbf16>, vector<32x96xbf16>, vector<16x96xf32> -> vector<16x96xf32>
    %199 = vector.broadcast %182 : vector<1x96xf32> to vector<16x96xf32>
    %200 = arith.addf %198, %199 : vector<16x96xf32>
    %201 = vector.extract_strided_slice %200 {offsets = [0, 0], sizes = [16, 32], strides = [1, 1]} : vector<16x96xf32> to vector<16x32xf32>
    %202 = vector.extract_strided_slice %200 {offsets = [0, 32], sizes = [16, 32], strides = [1, 1]} : vector<16x96xf32> to vector<16x32xf32>
    %203 = vector.extract_strided_slice %200 {offsets = [0, 64], sizes = [16, 32], strides = [1, 1]} : vector<16x96xf32> to vector<16x32xf32>
    %c1_64 = arith.constant 1 : index
    %c0_65 = arith.constant 0 : index
    %c96_66 = arith.constant 96 : index
    %204 = vector.load %arg4[%c1_64, %c0_65, %c96_66] : memref<2x32x320xbf16, #tpu.memory_space<vmem>>, vector<1x32x32xbf16>
    %205 = vector.shape_cast %204 : vector<1x32x32xbf16> to vector<32x32xbf16>
    %206 = tpu.concatenate %202, %202, %202, %202 in 0 : vector<16x32xf32>, vector<16x32xf32>, vector<16x32xf32>, vector<16x32xf32> -> vector<64x32xf32>
    %207 = arith.mulf %206, %7 : vector<64x32xf32>
    %208 = tpu.concatenate %203, %203, %203, %203 in 0 : vector<16x32xf32>, vector<16x32xf32>, vector<16x32xf32>, vector<16x32xf32> -> vector<64x32xf32>
    %209 = arith.mulf %208, %7 : vector<64x32xf32>
    %210 = arith.truncf %201 : vector<16x32xf32> to vector<16x32xbf16>
    %211 = arith.truncf %207 : vector<64x32xf32> to vector<64x32xbf16>
    %cst_67 = arith.constant dense<0.000000e+00> : vector<16x64xf32>
    %212 = tpu.matmul %210, %211, %cst_67 {dimension_numbers = #tpu.dot_dimension_numbers<[1], [1], [0], [0], [0, 0, 1, 0], [], []>} : vector<16x32xbf16>, vector<64x32xbf16>, vector<16x64xf32> -> vector<16x64xf32>
    %213 = arith.addf %212, %4 : vector<16x64xf32>
    %cst_68 = arith.constant dense<0xFF800000> : vector<16xf32>
    %214 = vector.multi_reduction <maximumf>, %213, %cst_68 [1] : vector<16x64xf32> to vector<16xf32>
    %215 = vector.shape_cast %214 : vector<16xf32> to vector<16x1xf32>
    %216 = vector.broadcast %215 : vector<16x1xf32> to vector<16x64xf32>
    %217 = arith.subf %213, %216 : vector<16x64xf32>
    %218 = math.exp %217 : vector<16x64xf32>
    %219 = tpu.concatenate %209, %7 in 1 : vector<64x32xf32>, vector<64x32xf32> -> vector<64x64xf32>
    %220 = arith.truncf %219 : vector<64x64xf32> to vector<64x64xbf16>
    %221 = arith.truncf %218 : vector<16x64xf32> to vector<16x64xbf16>
    %cst_69 = arith.constant dense<0.000000e+00> : vector<16x64xf32>
    %222 = tpu.matmul %221, %220, %cst_69 {dimension_numbers = #tpu.dot_dimension_numbers<[1], [0], [0], [1], [0, 0, 1, 1], [], []>} : vector<16x64xbf16>, vector<64x64xbf16>, vector<16x64xf32> -> vector<16x64xf32>
    %223 = vector.extract_strided_slice %222 {offsets = [0, 0], sizes = [16, 32], strides = [1, 1]} : vector<16x64xf32> to vector<16x32xf32>
    %224 = vector.extract_strided_slice %222 {offsets = [0, 32], sizes = [16, 32], strides = [1, 1]} : vector<16x64xf32> to vector<16x32xf32>
    %225 = arith.divf %223, %224 : vector<16x32xf32>
    %226 = arith.truncf %225 : vector<16x32xf32> to vector<16x32xbf16>
    %cst_70 = arith.constant dense<0.000000e+00> : vector<16x32xf32>
    %227 = tpu.matmul %226, %205, %cst_70 {dimension_numbers = #tpu.dot_dimension_numbers<[1], [0], [0], [1], [0, 0, 1, 1], [], []>} : vector<16x32xbf16>, vector<32x32xbf16>, vector<16x32xf32> -> vector<16x32xf32>
    %228 = vector.broadcast %183 : vector<1x32xf32> to vector<16x32xf32>
    %229 = arith.addf %227, %228 : vector<16x32xf32>
    %230 = arith.addf %229, %179 : vector<16x32xf32>
    %cst_71 = arith.constant dense<0.000000e+00> : vector<16xf32>
    %231 = vector.multi_reduction <add>, %230, %cst_71 [1] : vector<16x32xf32> to vector<16xf32>
    %232 = vector.shape_cast %231 : vector<16xf32> to vector<16x1xf32>
    %cst_72 = arith.constant 3.200000e+01 : f32
    %233 = vector.broadcast %cst_72 : f32 to vector<16x1xf32>
    %234 = arith.divf %232, %233 : vector<16x1xf32>
    %235 = vector.broadcast %234 : vector<16x1xf32> to vector<16x32xf32>
    %236 = arith.subf %230, %235 : vector<16x32xf32>
    %237 = arith.mulf %236, %236 : vector<16x32xf32>
    %cst_73 = arith.constant dense<0.000000e+00> : vector<16xf32>
    %238 = vector.multi_reduction <add>, %237, %cst_73 [1] : vector<16x32xf32> to vector<16xf32>
    %239 = vector.shape_cast %238 : vector<16xf32> to vector<16x1xf32>
    %cst_74 = arith.constant 3.200000e+01 : f32
    %240 = vector.broadcast %cst_74 : f32 to vector<16x1xf32>
    %241 = arith.divf %239, %240 : vector<16x1xf32>
    %242 = vector.broadcast %234 : vector<16x1xf32> to vector<16x32xf32>
    %243 = arith.subf %230, %242 : vector<16x32xf32>
    %cst_75 = arith.constant 9.99999997E-7 : f32
    %244 = vector.broadcast %cst_75 : f32 to vector<16x1xf32>
    %245 = arith.addf %241, %244 : vector<16x1xf32>
    %246 = math.rsqrt %245 : vector<16x1xf32>
    %247 = vector.broadcast %246 : vector<16x1xf32> to vector<16x32xf32>
    %248 = arith.mulf %243, %247 : vector<16x32xf32>
    %249 = vector.broadcast %184 : vector<1x32xf32> to vector<16x32xf32>
    %250 = arith.mulf %248, %249 : vector<16x32xf32>
    %251 = vector.broadcast %185 : vector<1x32xf32> to vector<16x32xf32>
    %252 = arith.addf %250, %251 : vector<16x32xf32>
    %c1_76 = arith.constant 1 : index
    %c0_77 = arith.constant 0 : index
    %c128_78 = arith.constant 128 : index
    %253 = vector.load %arg4[%c1_76, %c0_77, %c128_78] : memref<2x32x320xbf16, #tpu.memory_space<vmem>>, vector<1x32x64xbf16>
    %254 = vector.shape_cast %253 : vector<1x32x64xbf16> to vector<32x64xbf16>
    %cst_79 = arith.constant dense<0.000000e+00> : vector<16x64xf32>
    %255 = tpu.matmul %2, %254, %cst_79 {dimension_numbers = #tpu.dot_dimension_numbers<[1], [0], [0], [1], [0, 0, 1, 1], [], []>} : vector<16x32xbf16>, vector<32x64xbf16>, vector<16x64xf32> -> vector<16x64xf32>
    %256 = vector.broadcast %186 : vector<1x64xf32> to vector<16x64xf32>
    %257 = arith.addf %255, %256 : vector<16x64xf32>
    %258 = arith.truncf %252 : vector<16x32xf32> to vector<16x32xbf16>
    %c1_80 = arith.constant 1 : index
    %c0_81 = arith.constant 0 : index
    %c192_82 = arith.constant 192 : index
    %259 = vector.load %arg4[%c1_80, %c0_81, %c192_82] : memref<2x32x320xbf16, #tpu.memory_space<vmem>>, vector<1x32x32xbf16>
    %260 = vector.shape_cast %259 : vector<1x32x32xbf16> to vector<32x32xbf16>
    %cst_83 = arith.constant dense<0.000000e+00> : vector<16x32xf32>
    %261 = tpu.matmul %258, %260, %cst_83 {dimension_numbers = #tpu.dot_dimension_numbers<[1], [0], [0], [1], [0, 0, 1, 1], [], []>} : vector<16x32xbf16>, vector<32x32xbf16>, vector<16x32xf32> -> vector<16x32xf32>
    %262 = vector.broadcast %187 : vector<1x32xf32> to vector<16x32xf32>
    %263 = arith.addf %261, %262 : vector<16x32xf32>
    %264 = vector.extract_strided_slice %257 {offsets = [0, 0], sizes = [16, 32], strides = [1, 1]} : vector<16x64xf32> to vector<16x32xf32>
    %265 = vector.extract_strided_slice %257 {offsets = [0, 32], sizes = [16, 32], strides = [1, 1]} : vector<16x64xf32> to vector<16x32xf32>
    %c1_84 = arith.constant 1 : index
    %c0_85 = arith.constant 0 : index
    %c224_86 = arith.constant 224 : index
    %266 = vector.load %arg4[%c1_84, %c0_85, %c224_86] : memref<2x32x320xbf16, #tpu.memory_space<vmem>>, vector<1x32x32xbf16>
    %267 = vector.shape_cast %266 : vector<1x32x32xbf16> to vector<32x32xbf16>
    %268 = tpu.concatenate %265, %265, %265, %265 in 0 : vector<16x32xf32>, vector<16x32xf32>, vector<16x32xf32>, vector<16x32xf32> -> vector<64x32xf32>
    %269 = arith.mulf %268, %7 : vector<64x32xf32>
    %270 = tpu.concatenate %263, %263, %263, %263 in 0 : vector<16x32xf32>, vector<16x32xf32>, vector<16x32xf32>, vector<16x32xf32> -> vector<64x32xf32>
    %271 = arith.mulf %270, %7 : vector<64x32xf32>
    %272 = arith.truncf %264 : vector<16x32xf32> to vector<16x32xbf16>
    %273 = arith.truncf %269 : vector<64x32xf32> to vector<64x32xbf16>
    %cst_87 = arith.constant dense<0.000000e+00> : vector<16x64xf32>
    %274 = tpu.matmul %272, %273, %cst_87 {dimension_numbers = #tpu.dot_dimension_numbers<[1], [1], [0], [0], [0, 0, 1, 0], [], []>} : vector<16x32xbf16>, vector<64x32xbf16>, vector<16x64xf32> -> vector<16x64xf32>
    %275 = arith.addf %274, %6 : vector<16x64xf32>
    %cst_88 = arith.constant dense<0xFF800000> : vector<16xf32>
    %276 = vector.multi_reduction <maximumf>, %275, %cst_88 [1] : vector<16x64xf32> to vector<16xf32>
    %277 = vector.shape_cast %276 : vector<16xf32> to vector<16x1xf32>
    %278 = vector.broadcast %277 : vector<16x1xf32> to vector<16x64xf32>
    %279 = arith.subf %275, %278 : vector<16x64xf32>
    %280 = math.exp %279 : vector<16x64xf32>
    %281 = tpu.concatenate %271, %7 in 1 : vector<64x32xf32>, vector<64x32xf32> -> vector<64x64xf32>
    %282 = arith.truncf %281 : vector<64x64xf32> to vector<64x64xbf16>
    %283 = arith.truncf %280 : vector<16x64xf32> to vector<16x64xbf16>
    %cst_89 = arith.constant dense<0.000000e+00> : vector<16x64xf32>
    %284 = tpu.matmul %283, %282, %cst_89 {dimension_numbers = #tpu.dot_dimension_numbers<[1], [0], [0], [1], [0, 0, 1, 1], [], []>} : vector<16x64xbf16>, vector<64x64xbf16>, vector<16x64xf32> -> vector<16x64xf32>
    %285 = vector.extract_strided_slice %284 {offsets = [0, 0], sizes = [16, 32], strides = [1, 1]} : vector<16x64xf32> to vector<16x32xf32>
    %286 = vector.extract_strided_slice %284 {offsets = [0, 32], sizes = [16, 32], strides = [1, 1]} : vector<16x64xf32> to vector<16x32xf32>
    %287 = arith.divf %285, %286 : vector<16x32xf32>
    %288 = arith.truncf %287 : vector<16x32xf32> to vector<16x32xbf16>
    %cst_90 = arith.constant dense<0.000000e+00> : vector<16x32xf32>
    %289 = tpu.matmul %288, %267, %cst_90 {dimension_numbers = #tpu.dot_dimension_numbers<[1], [0], [0], [1], [0, 0, 1, 1], [], []>} : vector<16x32xbf16>, vector<32x32xbf16>, vector<16x32xf32> -> vector<16x32xf32>
    %290 = vector.broadcast %188 : vector<1x32xf32> to vector<16x32xf32>
    %291 = arith.addf %289, %290 : vector<16x32xf32>
    %292 = arith.addf %291, %252 : vector<16x32xf32>
    %cst_91 = arith.constant dense<0.000000e+00> : vector<16xf32>
    %293 = vector.multi_reduction <add>, %292, %cst_91 [1] : vector<16x32xf32> to vector<16xf32>
    %294 = vector.shape_cast %293 : vector<16xf32> to vector<16x1xf32>
    %cst_92 = arith.constant 3.200000e+01 : f32
    %295 = vector.broadcast %cst_92 : f32 to vector<16x1xf32>
    %296 = arith.divf %294, %295 : vector<16x1xf32>
    %297 = vector.broadcast %296 : vector<16x1xf32> to vector<16x32xf32>
    %298 = arith.subf %292, %297 : vector<16x32xf32>
    %299 = arith.mulf %298, %298 : vector<16x32xf32>
    %cst_93 = arith.constant dense<0.000000e+00> : vector<16xf32>
    %300 = vector.multi_reduction <add>, %299, %cst_93 [1] : vector<16x32xf32> to vector<16xf32>
    %301 = vector.shape_cast %300 : vector<16xf32> to vector<16x1xf32>
    %cst_94 = arith.constant 3.200000e+01 : f32
    %302 = vector.broadcast %cst_94 : f32 to vector<16x1xf32>
    %303 = arith.divf %301, %302 : vector<16x1xf32>
    %304 = vector.broadcast %296 : vector<16x1xf32> to vector<16x32xf32>
    %305 = arith.subf %292, %304 : vector<16x32xf32>
    %cst_95 = arith.constant 9.99999997E-7 : f32
    %306 = vector.broadcast %cst_95 : f32 to vector<16x1xf32>
    %307 = arith.addf %303, %306 : vector<16x1xf32>
    %308 = math.rsqrt %307 : vector<16x1xf32>
    %309 = vector.broadcast %308 : vector<16x1xf32> to vector<16x32xf32>
    %310 = arith.mulf %305, %309 : vector<16x32xf32>
    %311 = vector.broadcast %189 : vector<1x32xf32> to vector<16x32xf32>
    %312 = arith.mulf %310, %311 : vector<16x32xf32>
    %313 = vector.broadcast %190 : vector<1x32xf32> to vector<16x32xf32>
    %314 = arith.addf %312, %313 : vector<16x32xf32>
    %315 = arith.truncf %314 : vector<16x32xf32> to vector<16x32xbf16>
    %c1_96 = arith.constant 1 : index
    %c0_97 = arith.constant 0 : index
    %c256_98 = arith.constant 256 : index
    %316 = vector.load %arg4[%c1_96, %c0_97, %c256_98] : memref<2x32x320xbf16, #tpu.memory_space<vmem>>, vector<1x32x64xbf16>
    %317 = vector.shape_cast %316 : vector<1x32x64xbf16> to vector<32x64xbf16>
    %cst_99 = arith.constant dense<0.000000e+00> : vector<16x64xf32>
    %318 = tpu.matmul %315, %317, %cst_99 {dimension_numbers = #tpu.dot_dimension_numbers<[1], [0], [0], [1], [0, 0, 1, 1], [], []>} : vector<16x32xbf16>, vector<32x64xbf16>, vector<16x64xf32> -> vector<16x64xf32>
    %319 = vector.broadcast %191 : vector<1x64xf32> to vector<16x64xf32>
    %320 = arith.addf %318, %319 : vector<16x64xf32>
    %cst_100 = arith.constant 0.000000e+00 : f32
    %321 = vector.broadcast %cst_100 : f32 to vector<16x64xf32>
    %322 = arith.maximumf %320, %321 : vector<16x64xf32>
    %323 = arith.truncf %322 : vector<16x64xf32> to vector<16x64xbf16>
    %c1_101 = arith.constant 1 : index
    %c0_102 = arith.constant 0 : index
    %c0_103 = arith.constant 0 : index
    %324 = vector.load %arg5[%c1_101, %c0_102, %c0_103] : memref<2x64x32xbf16, #tpu.memory_space<vmem>>, vector<1x64x32xbf16>
    %325 = vector.shape_cast %324 : vector<1x64x32xbf16> to vector<64x32xbf16>
    %cst_104 = arith.constant dense<0.000000e+00> : vector<16x32xf32>
    %326 = tpu.matmul %323, %325, %cst_104 {dimension_numbers = #tpu.dot_dimension_numbers<[1], [0], [0], [1], [0, 0, 1, 1], [], []>} : vector<16x64xbf16>, vector<64x32xbf16>, vector<16x32xf32> -> vector<16x32xf32>
    %327 = vector.broadcast %192 : vector<1x32xf32> to vector<16x32xf32>
    %328 = arith.addf %326, %327 : vector<16x32xf32>
    %329 = arith.addf %328, %314 : vector<16x32xf32>
    %cst_105 = arith.constant dense<0.000000e+00> : vector<16xf32>
    %330 = vector.multi_reduction <add>, %329, %cst_105 [1] : vector<16x32xf32> to vector<16xf32>
    %331 = vector.shape_cast %330 : vector<16xf32> to vector<16x1xf32>
    %cst_106 = arith.constant 3.200000e+01 : f32
    %332 = vector.broadcast %cst_106 : f32 to vector<16x1xf32>
    %333 = arith.divf %331, %332 : vector<16x1xf32>
    %334 = vector.broadcast %333 : vector<16x1xf32> to vector<16x32xf32>
    %335 = arith.subf %329, %334 : vector<16x32xf32>
    %336 = arith.mulf %335, %335 : vector<16x32xf32>
    %cst_107 = arith.constant dense<0.000000e+00> : vector<16xf32>
    %337 = vector.multi_reduction <add>, %336, %cst_107 [1] : vector<16x32xf32> to vector<16xf32>
    %338 = vector.shape_cast %337 : vector<16xf32> to vector<16x1xf32>
    %cst_108 = arith.constant 3.200000e+01 : f32
    %339 = vector.broadcast %cst_108 : f32 to vector<16x1xf32>
    %340 = arith.divf %338, %339 : vector<16x1xf32>
    %341 = vector.broadcast %333 : vector<16x1xf32> to vector<16x32xf32>
    %342 = arith.subf %329, %341 : vector<16x32xf32>
    %cst_109 = arith.constant 9.99999997E-7 : f32
    %343 = vector.broadcast %cst_109 : f32 to vector<16x1xf32>
    %344 = arith.addf %340, %343 : vector<16x1xf32>
    %345 = math.rsqrt %344 : vector<16x1xf32>
    %346 = vector.broadcast %345 : vector<16x1xf32> to vector<16x32xf32>
    %347 = arith.mulf %342, %346 : vector<16x32xf32>
    %348 = vector.broadcast %193 : vector<1x32xf32> to vector<16x32xf32>
    %349 = arith.mulf %347, %348 : vector<16x32xf32>
    %350 = vector.broadcast %194 : vector<1x32xf32> to vector<16x32xf32>
    %351 = arith.addf %349, %350 : vector<16x32xf32>
    %c0_110 = arith.constant 0 : index
    %c0_111 = arith.constant 0 : index
    %352 = vector.load %arg7[%c0_110, %c0_111] : memref<16x32xf32, #tpu.memory_space<vmem>>, vector<16x32xf32>
    tpu.vector_store %arg7[%c0_110, %c0_111], %351 {strides = array<i32>} : memref<16x32xf32, #tpu.memory_space<vmem>>, vector<16x32xf32>,
    return
  }
}

</mosaic_0001>

<llo_original>
// kernel: decoder_forward.1
$region0: #{decoder_forward.1}
  #allocation0 [shape = 'u32[]', space=smem, size = 0x4, offset = 0x4, fixed_abs, tag = 'smem constant byte address 0x4 - core index']
  #allocation1 [shape = 'u32[72,128]{1,0:T(1,128)}', space=vmem, size = 0x9000, scoped, tag = 'internal scratch']
  %s0 = inlined_call_operand.vmem [shape: f32[16,32], index: 0, kind: input, shape index: {}]
  %s1 = inlined_call_operand.vmem [shape: f32[16,32], index: 1, kind: input, shape index: {}]
  %s2 = inlined_call_operand.vmem [shape: f32[2,16,64], index: 2, kind: input, shape index: {}]
  %s3 = inlined_call_operand.vmem [shape: f32[64,32], index: 3, kind: input, shape index: {}]
  %s4 = inlined_call_operand.vmem [shape: bf16[2,32,320], index: 4, kind: input, shape index: {}]
  %s5 = inlined_call_operand.vmem [shape: bf16[2,64,32], index: 5, kind: input, shape index: {}]
  %s6 = inlined_call_operand.vmem [shape: f32[2,13,96], index: 6, kind: input, shape index: {}]
  %s7 = inlined_call_operand.hbm [shape: f32[16,32], index: 7, kind: output, shape index: {}]
  %s8 = sld [smem:[#allocation0]]
  $region38: #{decoder_forward.1} parent=0
    _
  %s10 = ssub.s32 1, %s8
  %s11 = scalar_select 0, %s10, %s8
  $region1: #{decoder_forward.1} parent=0
    #allocation2 [shape = 'u8[8192]{0}', space=vmem, size = 0x2000, scoped, tag = 'output window, operand 0, single buffered']
    #allocation3 [shape = 's32[1]{0}', space=sflag, size = 0x4, scoped, tag = 'scoped memory for decoder_forward.1']
    %12 = vsyncpa [#allocation3], 0
    // Predicated region
    $region2: #{decoder_forward.1} parent=1 // pred_check
      _
    $region3: #{decoder_forward.1} parent=1 // pred_check_branch
      %14 = sbr.rel (0) target = $region5
    $region4: #{decoder_forward.1} parent=1 // pred_region
      _
    $region5: #{decoder_forward.1} parent=1 // pred_fallthru
      _
    // Predicated region
    $region6: #{decoder_forward.1} parent=1 // pred_check
      _
    $region7: #{decoder_forward.1} parent=1 // pred_check_branch
      %16 = sbr.rel (0) target = $region9
    $region8: #{decoder_forward.1} parent=1 // pred_region
      _
    $region9: #{decoder_forward.1} parent=1 // pred_fallthru
      _
    // Predicated region
    $region10: #{decoder_forward.1} parent=1 // pred_check
      _
    $region11: #{decoder_forward.1} parent=1 // pred_check_branch
      %18 = sbr.rel (0) target = $region13
    $region12: #{decoder_forward.1} parent=1 // pred_region
      _
    $region13: #{decoder_forward.1} parent=1 // pred_fallthru
      _
    // Predicated region
    $region14: #{decoder_forward.1} parent=1 // pred_check
      _
    $region15: #{decoder_forward.1} parent=1 // pred_check_branch
      %20 = sbr.rel (0) target = $region17
    $region16: #{decoder_forward.1} parent=1 // pred_region
      _
    $region17: #{decoder_forward.1} parent=1 // pred_fallthru
      _
    // Predicated region
    $region18: #{decoder_forward.1} parent=1 // pred_check
      _
    $region19: #{decoder_forward.1} parent=1 // pred_check_branch
      %22 = sbr.rel (0) target = $region21
    $region20: #{decoder_forward.1} parent=1 // pred_region
      _
    $region21: #{decoder_forward.1} parent=1 // pred_fallthru
      _
    // Predicated region
    $region22: #{decoder_forward.1} parent=1 // pred_check
      _
    $region23: #{decoder_forward.1} parent=1 // pred_check_branch
      %24 = sbr.rel (0) target = $region25
    $region24: #{decoder_forward.1} parent=1 // pred_region
      _
    $region25: #{decoder_forward.1} parent=1 // pred_fallthru
      _
    // Predicated region
    $region26: #{decoder_forward.1} parent=1 // pred_check
      _
    $region27: #{decoder_forward.1} parent=1 // pred_check_branch
      %26 = sbr.rel (0) target = $region29
    $region28: #{decoder_forward.1} parent=1 // pred_region
      _
    $region29: #{decoder_forward.1} parent=1 // pred_fallthru
      _
    %v28 = vld [vmem:[%s0] sm:$0xff]
    %v29 = vld [vmem:[%s0 + $0x8] sm:$0xff]
    %v30 = vld [vmem:[%s1] sm:$0xff]
    %v31 = vld [vmem:[%s1 + $0x8] sm:$0xff]
    %v32 = vpack.c.bf16 %v31, %v30
    %v33 = vld [vmem:[%s2] sm:$0xff]
    %v34 = vld [vmem:[%s2 + $0x8] sm:$0xff]
    %s35 = scalar_lea.vmem %s2, 16
    %v36 = vld [vmem:[%s35] sm:$0xff]
    %v37 = vld [vmem:[%s35 + $0x8] sm:$0xff]
    %v38 = vld [vmem:[%s3] sm:$0xff]
    %v39 = vld [vmem:[%s3 + $0x8] sm:$0xff]
    %v40 = vld [vmem:[%s3 + $0x10] sm:$0xff]
    %v41 = vld [vmem:[%s3 + $0x18] sm:$0xff]
    %v42 = vld [vmem:[%s3 + $0x20] sm:$0xff]
    %v43 = vld [vmem:[%s3 + $0x28] sm:$0xff]
    %v44 = vld [vmem:[%s3 + $0x30] sm:$0xff]
    %v45 = vld [vmem:[%s3 + $0x38] sm:$0xff]
    %v46 = vld [vmem:[%s6] sm:$0xff]
    %v47 = vld [vmem:[%s6 + $0x8] sm:$0x1f]
    %v48 = vpack.c.bf16 %v29, %v28
    %v49 = vld [vmem:[%s4] sm:$0xf]
    %v50 = vld [vmem:[%s4 + $0xc] sm:$0xf]
    %v51 = vld [vmem:[%s4 + $0x18] sm:$0xf]
    %v52 = vld [vmem:[%s4 + $0x24] sm:$0xf]
    %v53 = vperm.slane %v46, 0
    %v58 = vunpack.c.l.b16 %v49
    %v59 = vunpack.c.l.b16 %v50
    %v60 = vunpack.c.l.b16 %v51
    %v61 = vunpack.c.l.b16 %v52
    %v62 = vpack.c.b16 %v59, %v58
    %v63 = vpack.c.b16 %v61, %v60
    %vm66 = vcmask 261120
    %v68 = vsel %vm66, %v48, 0
    %70 = vmatpush.bf16.msra.mxu0 0
    %71 = vmatpush.bf16.msra.mxu0 0
    %72 = vmatpush.bf16.msra.mxu0 0
    %73 = vmatpush.bf16.msra.mxu0 0
    %74 = vmatpush.bf16.msra.mxu0 0
    %75 = vmatpush.bf16.msra.mxu0 0
    %76 = vmatpush.bf16.msra.mxu0 %v63
    %77 = vmatpush.bf16.msra.mxu0 %v62
    %78 = vmatmul.bf16.gmra.mxu0 %v68
    %v79 = vpop.f32.mrf.mxu0
    %v80 = vadd.f32 %v53, %v79
    %v81 = vpop.f32.mrf.mxu0
    %v82 = vadd.f32 %v53, %v81
    %83 = vdwg.mxu0
    %92 = vrot.lane.b32.xlu0 %v38, 32
    %v93 = vpop.permute.xlu0 %92
    %94 = vrot.lane.b32.xlu0 %v39, 32
    %v95 = vpop.permute.xlu0 %94
    %96 = vrot.lane.b32.xlu0 %v40, 32
    %v97 = vpop.permute.xlu0 %96
    %98 = vrot.lane.b32.xlu0 %v41, 32
    %v99 = vpop.permute.xlu0 %98
    %100 = vrot.lane.b32.xlu0 %v42, 32
    %v101 = vpop.permute.xlu0 %100
    %102 = vrot.lane.b32.xlu0 %v43, 32
    %v103 = vpop.permute.xlu0 %102
    %104 = vrot.lane.b32.xlu0 %v44, 32
    %v105 = vpop.permute.xlu0 %104
    %106 = vrot.lane.b32.xlu0 %v45, 32
    %v107 = vpop.permute.xlu0 %106
    %v116 = vmul.f32 %v80, %v93
    %v117 = vmul.f32 %v82, %v95
    %v118 = vmul.f32 %v80, %v97
    %v119 = vmul.f32 %v82, %v99
    %v120 = vmul.f32 %v80, %v101
    %v121 = vmul.f32 %v82, %v103
    %v122 = vmul.f32 %v80, %v105
    %v123 = vmul.f32 %v82, %v107
    %124 = vrot.lane.b32.xlu0 %v38, 64
    %v125 = vpop.permute.xlu0 %124
    %126 = vrot.lane.b32.xlu0 %v39, 64
    %v127 = vpop.permute.xlu0 %126
    %128 = vrot.lane.b32.xlu0 %v40, 64
    %v129 = vpop.permute.xlu0 %128
    %130 = vrot.lane.b32.xlu0 %v41, 64
    %v131 = vpop.permute.xlu0 %130
    %132 = vrot.lane.b32.xlu0 %v42, 64
    %v133 = vpop.permute.xlu0 %132
    %134 = vrot.lane.b32.xlu0 %v43, 64
    %v135 = vpop.permute.xlu0 %134
    %136 = vrot.lane.b32.xlu0 %v44, 64
    %v137 = vpop.permute.xlu0 %136
    %138 = vrot.lane.b32.xlu0 %v45, 64
    %v139 = vpop.permute.xlu0 %138
    %v148 = vmul.f32 %v80, %v125
    %v149 = vmul.f32 %v82, %v127
    %v150 = vmul.f32 %v80, %v129
    %v151 = vmul.f32 %v82, %v131
    %v152 = vmul.f32 %v80, %v133
    %v153 = vmul.f32 %v82, %v135
    %v154 = vmul.f32 %v80, %v137
    %v155 = vmul.f32 %v82, %v139
    %v156 = vpack.c.bf16 %v82, %v80
    %v157 = vpack.c.bf16 %v117, %v116
    %v158 = vpack.c.bf16 %v119, %v118
    %v159 = vpack.c.bf16 %v121, %v120
    %v160 = vpack.c.bf16 %v123, %v122
    %165 = vrot.lane.b32.xlu0 %v157, 96
    %v166 = vpop.permute.xlu0 %165
    %167 = vrot.lane.b32.xlu0 %v158, 96
    %v168 = vpop.permute.xlu0 %167
    %169 = vrot.lane.b32.xlu0 %v159, 96
    %v170 = vpop.permute.xlu0 %169
    %171 = vrot.lane.b32.xlu0 %v160, 96
    %v172 = vpop.permute.xlu0 %171
    %v174 = vsel %vm66, %v156, 0
    %v177 = vsel %vm66, %v166, 0
    %v180 = vsel %vm66, %v168, 0
    %v183 = vsel %vm66, %v170, 0
    %v186 = vsel %vm66, %v172, 0
    %188 = vmatpush.bf16.xpose.msra.mxu0 0
    %189 = vmatpush.bf16.xpose.msra.mxu0 0
    %190 = vmatpush.bf16.xpose.msra.mxu0 0
    %191 = vmatpush.bf16.xpose.msra.mxu0 0
    %192 = vmatpush.bf16.xpose.msra.mxu0 %v186
    %193 = vmatpush.bf16.xpose.msra.mxu0 %v183
    %194 = vmatpush.bf16.xpose.msra.mxu0 %v180
    %195 = vmatpush.bf16.xpose.msra.mxu0 %v177
    %196 = vmatmul.bf16.gmra.mxu0 %v174
    %v197 = vpop.f32.mrf.mxu0
    %v198 = vadd.f32 %v33, %v197
    %v199 = vpop.f32.mrf.mxu0
    %v200 = vadd.f32 %v34, %v199
    %201 = vdwg.mxu0
    %vm202 = vcmask 523264
    %v203 = vsel %vm202, %v198, -inf
    %204 = vmax.xlane.f32.xlu0 %v203
    %v205 = vpop.xlane.xlu0 %204
    %v206 = vsel %vm202, %v200, -inf
    %207 = vmax.xlane.f32.xlu0 %v206
    %v208 = vpop.xlane.xlu0 %207
    %v209 = vsub.f32 %v198, %v205
    %v210 = vsub.f32 %v200, %v208
    %v211 = vmul.f32 %v209, 1.442695
    %v212 = vpow.pop %v211
    %v213 = vmul.f32 %v210, 1.442695
    %v214 = vpow.pop %v213
    %223 = vrot.lane.b32.xlu0 %v148, 64
    %v224 = vpop.permute.xlu0 %223
    %225 = vrot.lane.b32.xlu0 %v149, 64
    %v226 = vpop.permute.xlu0 %225
    %227 = vrot.lane.b32.xlu0 %v150, 64
    %v228 = vpop.permute.xlu0 %227
    %229 = vrot.lane.b32.xlu0 %v151, 64
    %v230 = vpop.permute.xlu0 %229
    %231 = vrot.lane.b32.xlu0 %v152, 64
    %v232 = vpop.permute.xlu0 %231
    %233 = vrot.lane.b32.xlu0 %v153, 64
    %v234 = vpop.permute.xlu0 %233
    %235 = vrot.lane.b32.xlu0 %v154, 64
    %v236 = vpop.permute.xlu0 %235
    %237 = vrot.lane.b32.xlu0 %v155, 64
    %v238 = vpop.permute.xlu0 %237
    %v247 = vsel %vm66, %v224, %v93
    %v248 = vsel %vm66, %v226, %v95
    %v249 = vsel %vm66, %v228, %v97
    %v250 = vsel %vm66, %v230, %v99
    %v251 = vsel %vm66, %v232, %v101
    %v252 = vsel %vm66, %v234, %v103
    %v253 = vsel %vm66, %v236, %v105
    %v254 = vsel %vm66, %v238, %v107
    %v255 = vpack.c.bf16 %v248, %v247
    %v256 = vpack.c.bf16 %v250, %v249
    %v257 = vpack.c.bf16 %v252, %v251
    %v258 = vpack.c.bf16 %v254, %v253
    %v259 = vpack.c.bf16 %v214, %v212
    %v261 = vsel %vm202, %v259, 0
    %263 = vmatpush.bf16.msra.mxu0 0
    %264 = vmatpush.bf16.msra.mxu0 0
    %265 = vmatpush.bf16.msra.mxu0 0
    %266 = vmatpush.bf16.msra.mxu0 0
    %267 = vmatpush.bf16.msra.mxu0 %v258
    %268 = vmatpush.bf16.msra.mxu0 %v257
    %269 = vmatpush.bf16.msra.mxu0 %v256
    %270 = vmatpush.bf16.msra.mxu0 %v255
    %271 = vmatmul.bf16.gmra.mxu0 %v261
    %v272 = vpop.f32.mrf.mxu0
    %v273 = vadd.f32 0.0, %v272
    %v274 = vpop.f32.mrf.mxu0
    %v275 = vadd.f32 0.0, %v274
    %276 = vdwg.mxu0
    %279 = vrot.lane.b32.xlu0 %v273, 96
    %v280 = vpop.permute.xlu0 %279
    %281 = vrot.lane.b32.xlu0 %v275, 96
    %v282 = vpop.permute.xlu0 %281
    %v285 = vrcp.pop %v280
    %v286 = vmul.f32 %v280, %v285
    %v287 = vsub.f32 1.0, %v286
    %v288 = vmul.f32 %v285, %v287
    %v289 = vadd.f32 %v285, %v288
    %vm290 = vweird.f32 %v280
    %vm291 = vweird.f32 %v285
    %vm292 = vmor %vm290, %vm291
    %v293 = vsel %vm292, %v285, %v289
    %v294 = vand.u32 2147483647, %v280
    %vm295 = vcmp.eq.f32.partialorder %v294, 8.507059e+37
    %v296 = vand.u32 %v280, 2147483648
    %v297 = vor.u32 1.1754944e-38, %v296
    %v298 = vsel %vm295, %v297, %v293
    %v299 = vmul.f32 %v273, %v298
    %v300 = vrcp.pop %v282
    %v301 = vmul.f32 %v282, %v300
    %v302 = vsub.f32 1.0, %v301
    %v303 = vmul.f32 %v300, %v302
    %v304 = vadd.f32 %v300, %v303
    %vm305 = vweird.f32 %v282
    %vm306 = vweird.f32 %v300
    %vm307 = vmor %vm305, %vm306
    %v308 = vsel %vm307, %v300, %v304
    %v309 = vand.u32 2147483647, %v282
    %vm310 = vcmp.eq.f32.partialorder %v309, 8.507059e+37
    %v311 = vand.u32 %v282, 2147483648
    %v312 = vor.u32 1.1754944e-38, %v311
    %v313 = vsel %vm310, %v312, %v308
    %v314 = vmul.f32 %v275, %v313
    %v315 = vpack.c.bf16 %v314, %v299
    %v316 = vperm.slane %v46, 1
    %317 = vrot.lane.b32.xlu0 %v62, 32
    %v318 = vpop.permute.xlu0 %317
    %319 = vrot.lane.b32.xlu0 %v63, 32
    %v320 = vpop.permute.xlu0 %319
    %v324 = vsel %vm66, %v315, 0
    %326 = vmatpush.bf16.msra.mxu0 0
    %327 = vmatpush.bf16.msra.mxu0 0
    %328 = vmatpush.bf16.msra.mxu0 0
    %329 = vmatpush.bf16.msra.mxu0 0
    %330 = vmatpush.bf16.msra.mxu0 0
    %331 = vmatpush.bf16.msra.mxu0 0
    %332 = vmatpush.bf16.msra.mxu0 %v320
    %333 = vmatpush.bf16.msra.mxu0 %v318
    %334 = vmatmul.bf16.gmra.mxu0 %v324
    %v335 = vpop.f32.mrf.mxu0
    %v336 = vadd.f32 %v316, %v335
    %v337 = vpop.f32.mrf.mxu0
    %v338 = vadd.f32 %v316, %v337
    %339 = vdwg.mxu0
    %v340 = vadd.f32 %v336, %v28
    %v341 = vadd.f32 %v338, %v29
    %v342 = vsel %vm66, %v340, 0.0
    %343 = vadd.xlane.f32.xlu0 %v342
    %v344 = vpop.xlane.xlu0 %343
    %v345 = vsel %vm66, %v341, 0.0
    %346 = vadd.xlane.f32.xlu0 %v345
    %v347 = vpop.xlane.xlu0 %346
    %v348 = vrcp.pop 32.0
    %v349 = vmul.f32 32.0, %v348
    %v350 = vsub.f32 1.0, %v349
    %v351 = vmul.f32 %v348, %v350
    %v352 = vadd.f32 %v348, %v351
    %vm353 = vweird.f32 %v348
    %v354 = vsel %vm353, %v348, %v352
    %v355 = vmul.f32 %v344, %v354
    %v356 = vmul.f32 %v347, %v354
    %v357 = vsub.f32 %v340, %v355
    %v358 = vsub.f32 %v341, %v356
    %v359 = vmul.f32 %v357, %v357
    %v360 = vmul.f32 %v358, %v358
    %v361 = vsel %vm66, %v359, 0.0
    %362 = vadd.xlane.f32.xlu0 %v361
    %v363 = vpop.xlane.xlu0 %362
    %v364 = vsel %vm66, %v360, 0.0
    %365 = vadd.xlane.f32.xlu0 %v364
    %v366 = vpop.xlane.xlu0 %365
    %v367 = vmul.f32 %v363, %v354
    %v368 = vmul.f32 %v366, %v354
    %v369 = vadd.f32 %v367, 1e-06
    %v370 = vadd.f32 %v368, 1e-06
    %v371 = vrsqrt.pop %v369
    %v372 = vmul.f32 %v371, %v369
    %v373 = vmul.f32 %v372, %v371
    %v374 = vmul.f32 0.5, %v373
    %v375 = vsub.f32 1.5, %v374
    %v376 = vmul.f32 %v371, %v375
    %vm377 = vweird.f32 %v369
    %vm378 = vweird.f32 %v371
    %vm379 = vmor %vm377, %vm378
    %v380 = vsel %vm379, %v371, %v376
    %v381 = vrsqrt.pop %v370
    %v382 = vmul.f32 %v381, %v370
    %v383 = vmul.f32 %v382, %v381
    %v384 = vmul.f32 0.5, %v383
    %v385 = vsub.f32 1.5, %v384
    %v386 = vmul.f32 %v381, %v385
    %vm387 = vweird.f32 %v370
    %vm388 = vweird.f32 %v381
    %vm389 = vmor %vm387, %vm388
    %v390 = vsel %vm389, %v381, %v386
    %v391 = vmul.f32 %v357, %v380
    %v392 = vmul.f32 %v358, %v390
    %v393 = vperm.slane %v46, 2
    %v394 = vmul.f32 %v391, %v393
    %v395 = vmul.f32 %v392, %v393
    %v396 = vperm.slane %v46, 3
    %v397 = vadd.f32 %v394, %v396
    %v398 = vadd.f32 %v395, %v396
    %v399 = vld [vmem:[%s4 + $0x4] sm:$0xf]
    %v400 = vld [vmem:[%s4 + $0x10] sm:$0xf]
    %v401 = vld [vmem:[%s4 + $0x1c] sm:$0xf]
    %v402 = vld [vmem:[%s4 + $0x28] sm:$0xf]
    %v403 = vperm.slane %v46, 4
    %v408 = vunpack.c.l.b16 %v399
    %v409 = vunpack.c.l.b16 %v400
    %v410 = vunpack.c.l.b16 %v401
    %v411 = vunpack.c.l.b16 %v402
    %v412 = vpack.c.b16 %v409, %v408
    %v413 = vpack.c.b16 %v411, %v410
    %v417 = vsel %vm66, %v32, 0
    %419 = vmatpush.bf16.msra.mxu0 0
    %420 = vmatpush.bf16.msra.mxu0 0
    %421 = vmatpush.bf16.msra.mxu0 0
    %422 = vmatpush.bf16.msra.mxu0 0
    %423 = vmatpush.bf16.msra.mxu0 0
    %424 = vmatpush.bf16.msra.mxu0 0
    %425 = vmatpush.bf16.msra.mxu0 %v413
    %426 = vmatpush.bf16.msra.mxu0 %v412
    %427 = vmatmul.bf16.gmra.mxu0 %v417
    %v428 = vpop.f32.mrf.mxu0
    %v429 = vadd.f32 %v403, %v428
    %v430 = vpop.f32.mrf.mxu0
    %v431 = vadd.f32 %v403, %v430
    %432 = vdwg.mxu0
    %v433 = vpack.c.bf16 %v398, %v397
    %v434 = vperm.slane %v46, 5
    %435 = vrot.lane.b32.xlu0 %v412, 64
    %v436 = vpop.permute.xlu0 %435
    %437 = vrot.lane.b32.xlu0 %v413, 64
    %v438 = vpop.permute.xlu0 %437
    %v442 = vsel %vm66, %v433, 0
    %444 = vmatpush.bf16.msra.mxu0 0
    %445 = vmatpush.bf16.msra.mxu0 0
    %446 = vmatpush.bf16.msra.mxu0 0
    %447 = vmatpush.bf16.msra.mxu0 0
    %448 = vmatpush.bf16.msra.mxu0 0
    %449 = vmatpush.bf16.msra.mxu0 0
    %450 = vmatpush.bf16.msra.mxu0 %v438
    %451 = vmatpush.bf16.msra.mxu0 %v436
    %452 = vmatmul.bf16.gmra.mxu0 %v442
    %v453 = vpop.f32.mrf.mxu0
    %v454 = vadd.f32 %v434, %v453
    %v455 = vpop.f32.mrf.mxu0
    %v456 = vadd.f32 %v434, %v455
    %457 = vdwg.mxu0
    %v458 = vmul.f32 %v429, %v93
    %v459 = vmul.f32 %v431, %v95
    %v460 = vmul.f32 %v429, %v97
    %v461 = vmul.f32 %v431, %v99
    %v462 = vmul.f32 %v429, %v101
    %v463 = vmul.f32 %v431, %v103
    %v464 = vmul.f32 %v429, %v105
    %v465 = vmul.f32 %v431, %v107
    %v466 = vmul.f32 %v454, %v38
    %v467 = vmul.f32 %v456, %v39
    %v468 = vmul.f32 %v454, %v40
    %v469 = vmul.f32 %v456, %v41
    %v470 = vmul.f32 %v454, %v42
    %v471 = vmul.f32 %v456, %v43
    %v472 = vmul.f32 %v454, %v44
    %v473 = vmul.f32 %v456, %v45
    %v474 = vpack.c.bf16 %v431, %v429
    %v475 = vpack.c.bf16 %v459, %v458
    %v476 = vpack.c.bf16 %v461, %v460
    %v477 = vpack.c.bf16 %v463, %v462
    %v478 = vpack.c.bf16 %v465, %v464
    %483 = vrot.lane.b32.xlu0 %v475, 96
    %v484 = vpop.permute.xlu0 %483
    %485 = vrot.lane.b32.xlu0 %v476, 96
    %v486 = vpop.permute.xlu0 %485
    %487 = vrot.lane.b32.xlu0 %v477, 96
    %v488 = vpop.permute.xlu0 %487
    %489 = vrot.lane.b32.xlu0 %v478, 96
    %v490 = vpop.permute.xlu0 %489
    %v492 = vsel %vm66, %v474, 0
    %v495 = vsel %vm66, %v484, 0
    %v498 = vsel %vm66, %v486, 0
    %v501 = vsel %vm66, %v488, 0
    %v504 = vsel %vm66, %v490, 0
    %506 = vmatpush.bf16.xpose.msra.mxu0 0
    %507 = vmatpush.bf16.xpose.msra.mxu0 0
    %508 = vmatpush.bf16.xpose.msra.mxu0 0
    %509 = vmatpush.bf16.xpose.msra.mxu0 0
    %510 = vmatpush.bf16.xpose.msra.mxu0 %v504
    %511 = vmatpush.bf16.xpose.msra.mxu0 %v501
    %512 = vmatpush.bf16.xpose.msra.mxu0 %v498
    %513 = vmatpush.bf16.xpose.msra.mxu0 %v495
    %514 = vmatmul.bf16.gmra.mxu0 %v492
    %v515 = vpop.f32.mrf.mxu0
    %v516 = vadd.f32 %v36, %v515
    %v517 = vpop.f32.mrf.mxu0
    %v518 = vadd.f32 %v37, %v517
    %519 = vdwg.mxu0
    %v520 = vsel %vm202, %v516, -inf
    %521 = vmax.xlane.f32.xlu0 %v520
    %v522 = vpop.xlane.xlu0 %521
    %v523 = vsel %vm202, %v518, -inf
    %524 = vmax.xlane.f32.xlu0 %v523
    %v525 = vpop.xlane.xlu0 %524
    %v526 = vsub.f32 %v516, %v522
    %v527 = vsub.f32 %v518, %v525
    %v528 = vmul.f32 %v526, 1.442695
    %v529 = vpow.pop %v528
    %v530 = vmul.f32 %v527, 1.442695
    %v531 = vpow.pop %v530
    %v532 = vsel %vm66, %v466, %v93
    %v533 = vsel %vm66, %v467, %v95
    %v534 = vsel %vm66, %v468, %v97
    %v535 = vsel %vm66, %v469, %v99
    %v536 = vsel %vm66, %v470, %v101
    %v537 = vsel %vm66, %v471, %v103
    %v538 = vsel %vm66, %v472, %v105
    %v539 = vsel %vm66, %v473, %v107
    %v540 = vpack.c.bf16 %v533, %v532
    %v541 = vpack.c.bf16 %v535, %v534
    %v542 = vpack.c.bf16 %v537, %v536
    %v543 = vpack.c.bf16 %v539, %v538
    %v544 = vpack.c.bf16 %v531, %v529
    %v546 = vsel %vm202, %v544, 0
    %548 = vmatpush.bf16.msra.mxu0 0
    %549 = vmatpush.bf16.msra.mxu0 0
    %550 = vmatpush.bf16.msra.mxu0 0
    %551 = vmatpush.bf16.msra.mxu0 0
    %552 = vmatpush.bf16.msra.mxu0 %v543
    %553 = vmatpush.bf16.msra.mxu0 %v542
    %554 = vmatpush.bf16.msra.mxu0 %v541
    %555 = vmatpush.bf16.msra.mxu0 %v540
    %556 = vmatmul.bf16.gmra.mxu0 %v546
    %v557 = vpop.f32.mrf.mxu0
    %v558 = vadd.f32 0.0, %v557
    %v559 = vpop.f32.mrf.mxu0
    %v560 = vadd.f32 0.0, %v559
    %561 = vdwg.mxu0
    %564 = vrot.lane.b32.xlu0 %v558, 96
    %v565 = vpop.permute.xlu0 %564
    %566 = vrot.lane.b32.xlu0 %v560, 96
    %v567 = vpop.permute.xlu0 %566
    %v570 = vrcp.pop %v565
    %v571 = vmul.f32 %v565, %v570
    %v572 = vsub.f32 1.0, %v571
    %v573 = vmul.f32 %v570, %v572
    %v574 = vadd.f32 %v570, %v573
    %vm575 = vweird.f32 %v565
    %vm576 = vweird.f32 %v570
    %vm577 = vmor %vm575, %vm576
    %v578 = vsel %vm577, %v570, %v574
    %v579 = vand.u32 2147483647, %v565
    %vm580 = vcmp.eq.f32.partialorder %v579, 8.507059e+37
    %v581 = vand.u32 %v565, 2147483648
    %v582 = vor.u32 1.1754944e-38, %v581
    %v583 = vsel %vm580, %v582, %v578
    %v584 = vmul.f32 %v558, %v583
    %v585 = vrcp.pop %v567
    %v586 = vmul.f32 %v567, %v585
    %v587 = vsub.f32 1.0, %v586
    %v588 = vmul.f32 %v585, %v587
    %v589 = vadd.f32 %v585, %v588
    %vm590 = vweird.f32 %v567
    %vm591 = vweird.f32 %v585
    %vm592 = vmor %vm590, %vm591
    %v593 = vsel %vm592, %v585, %v589
    %v594 = vand.u32 2147483647, %v567
    %vm595 = vcmp.eq.f32.partialorder %v594, 8.507059e+37
    %v596 = vand.u32 %v567, 2147483648
    %v597 = vor.u32 1.1754944e-38, %v596
    %v598 = vsel %vm595, %v597, %v593
    %v599 = vmul.f32 %v560, %v598
    %v600 = vpack.c.bf16 %v599, %v584
    %v601 = vperm.slane %v46, 6
    %602 = vrot.lane.b32.xlu0 %v412, 32
    %v603 = vpop.permute.xlu0 %602
    %604 = vrot.lane.b32.xlu0 %v413, 32
    %v605 = vpop.permute.xlu0 %604
    %v609 = vsel %vm66, %v600, 0
    %611 = vmatpush.bf16.msra.mxu0 0
    %612 = vmatpush.bf16.msra.mxu0 0
    %613 = vmatpush.bf16.msra.mxu0 0
    %614 = vmatpush.bf16.msra.mxu0 0
    %615 = vmatpush.bf16.msra.mxu0 0
    %616 = vmatpush.bf16.msra.mxu0 0
    %617 = vmatpush.bf16.msra.mxu0 %v605
    %618 = vmatpush.bf16.msra.mxu0 %v603
    %619 = vmatmul.bf16.gmra.mxu0 %v609
    %v620 = vpop.f32.mrf.mxu0
    %v621 = vadd.f32 %v601, %v620
    %v622 = vpop.f32.mrf.mxu0
    %v623 = vadd.f32 %v601, %v622
    %624 = vdwg.mxu0
    %v625 = vadd.f32 %v621, %v397
    %v626 = vadd.f32 %v623, %v398
    %v627 = vsel %vm66, %v625, 0.0
    %628 = vadd.xlane.f32.xlu0 %v627
    %v629 = vpop.xlane.xlu0 %628
    %v630 = vsel %vm66, %v626, 0.0
    %631 = vadd.xlane.f32.xlu0 %v630
    %v632 = vpop.xlane.xlu0 %631
    %v633 = vmul.f32 %v629, %v354
    %v634 = vmul.f32 %v632, %v354
    %v635 = vsub.f32 %v625, %v633
    %v636 = vsub.f32 %v626, %v634
    %v637 = vmul.f32 %v635, %v635
    %v638 = vmul.f32 %v636, %v636
    %v639 = vsel %vm66, %v637, 0.0
    %640 = vadd.xlane.f32.xlu0 %v639
    %v641 = vpop.xlane.xlu0 %640
    %v642 = vsel %vm66, %v638, 0.0
    %643 = vadd.xlane.f32.xlu0 %v642
    %v644 = vpop.xlane.xlu0 %643
    %v645 = vmul.f32 %v641, %v354
    %v646 = vmul.f32 %v644, %v354
    %v647 = vadd.f32 %v645, 1e-06
    %v648 = vadd.f32 %v646, 1e-06
    %v649 = vrsqrt.pop %v647
    %v650 = vmul.f32 %v649, %v647
    %v651 = vmul.f32 %v650, %v649
    %v652 = vmul.f32 0.5, %v651
    %v653 = vsub.f32 1.5, %v652
    %v654 = vmul.f32 %v649, %v653
    %vm655 = vweird.f32 %v647
    %vm656 = vweird.f32 %v649
    %vm657 = vmor %vm655, %vm656
    %v658 = vsel %vm657, %v649, %v654
    %v659 = vrsqrt.pop %v648
    %v660 = vmul.f32 %v659, %v648
    %v661 = vmul.f32 %v660, %v659
    %v662 = vmul.f32 0.5, %v661
    %v663 = vsub.f32 1.5, %v662
    %v664 = vmul.f32 %v659, %v663
    %vm665 = vweird.f32 %v648
    %vm666 = vweird.f32 %v659
    %vm667 = vmor %vm665, %vm666
    %v668 = vsel %vm667, %v659, %v664
    %v669 = vmul.f32 %v635, %v658
    %v670 = vmul.f32 %v636, %v668
    %v671 = vperm.slane %v46, 7
    %v672 = vmul.f32 %v669, %v671
    %v673 = vmul.f32 %v670, %v671
    %v674 = vperm.slane %v47, 0
    %v675 = vadd.f32 %v672, %v674
    %v676 = vadd.f32 %v673, %v674
    %v677 = vpack.c.bf16 %v676, %v675
    %v678 = vld [vmem:[%s4 + $0x8] sm:$0xf]
    %v679 = vld [vmem:[%s4 + $0x14] sm:$0xf]
    %v680 = vld [vmem:[%s4 + $0x20] sm:$0xf]
    %v681 = vld [vmem:[%s4 + $0x2c] sm:$0xf]
    %v682 = vperm.slane %v47, 1
    %v687 = vunpack.c.l.b16 %v678
    %v688 = vunpack.c.l.b16 %v679
    %v689 = vunpack.c.l.b16 %v680
    %v690 = vunpack.c.l.b16 %v681
    %v691 = vpack.c.b16 %v688, %v687
    %v692 = vpack.c.b16 %v690, %v689
    %v696 = vsel %vm66, %v677, 0
    %698 = vmatpush.bf16.msra.mxu0 0
    %699 = vmatpush.bf16.msra.mxu0 0
    %700 = vmatpush.bf16.msra.mxu0 0
    %701 = vmatpush.bf16.msra.mxu0 0
    %702 = vmatpush.bf16.msra.mxu0 0
    %703 = vmatpush.bf16.msra.mxu0 0
    %704 = vmatpush.bf16.msra.mxu0 %v692
    %705 = vmatpush.bf16.msra.mxu0 %v691
    %706 = vmatmul.bf16.gmra.mxu0 %v696
    %v707 = vpop.f32.mrf.mxu0
    %v708 = vadd.f32 %v682, %v707
    %v709 = vpop.f32.mrf.mxu0
    %v710 = vadd.f32 %v682, %v709
    %711 = vdwg.mxu0
    %v712 = vmax.f32 %v708, 0.0
    %v713 = vmax.f32 %v710, 0.0
    %v714 = vpack.c.bf16 %v713, %v712
    %v715 = vld [vmem:[%s5] sm:$0xf]
    %v716 = vld [vmem:[%s5 + $0x4] sm:$0xf]
    %v717 = vld [vmem:[%s5 + $0x8] sm:$0xf]
    %v718 = vld [vmem:[%s5 + $0xc] sm:$0xf]
    %v719 = vld [vmem:[%s5 + $0x10] sm:$0xf]
    %v720 = vld [vmem:[%s5 + $0x14] sm:$0xf]
    %v721 = vld [vmem:[%s5 + $0x18] sm:$0xf]
    %v722 = vld [vmem:[%s5 + $0x1c] sm:$0xf]
    %v723 = vperm.slane %v47, 2
    %v732 = vunpack.c.l.b16 %v715
    %v733 = vunpack.c.l.b16 %v716
    %v734 = vunpack.c.l.b16 %v717
    %v735 = vunpack.c.l.b16 %v718
    %v736 = vunpack.c.l.b16 %v719
    %v737 = vunpack.c.l.b16 %v720
    %v738 = vunpack.c.l.b16 %v721
    %v739 = vunpack.c.l.b16 %v722
    %v740 = vpack.c.b16 %v733, %v732
    %v741 = vpack.c.b16 %v735, %v734
    %v742 = vpack.c.b16 %v737, %v736
    %v743 = vpack.c.b16 %v739, %v738
    %v749 = vsel %vm202, %v714, 0
    %751 = vmatpush.bf16.msra.mxu0 0
    %752 = vmatpush.bf16.msra.mxu0 0
    %753 = vmatpush.bf16.msra.mxu0 0
    %754 = vmatpush.bf16.msra.mxu0 0
    %755 = vmatpush.bf16.msra.mxu0 %v743
    %756 = vmatpush.bf16.msra.mxu0 %v742
    %757 = vmatpush.bf16.msra.mxu0 %v741
    %758 = vmatpush.bf16.msra.mxu0 %v740
    %759 = vmatmul.bf16.gmra.mxu0 %v749
    %v760 = vpop.f32.mrf.mxu0
    %v761 = vadd.f32 %v723, %v760
    %v762 = vpop.f32.mrf.mxu0
    %v763 = vadd.f32 %v723, %v762
    %764 = vdwg.mxu0
    %v765 = vadd.f32 %v761, %v675
    %v766 = vadd.f32 %v763, %v676
    %v767 = vsel %vm66, %v765, 0.0
    %768 = vadd.xlane.f32.xlu0 %v767
    %v769 = vpop.xlane.xlu0 %768
    %v770 = vsel %vm66, %v766, 0.0
    %771 = vadd.xlane.f32.xlu0 %v770
    %v772 = vpop.xlane.xlu0 %771
    %v773 = vmul.f32 %v769, %v354
    %v774 = vmul.f32 %v772, %v354
    %v775 = vsub.f32 %v765, %v773
    %v776 = vsub.f32 %v766, %v774
    %v777 = vmul.f32 %v775, %v775
    %v778 = vmul.f32 %v776, %v776
    %v779 = vsel %vm66, %v777, 0.0
    %780 = vadd.xlane.f32.xlu0 %v779
    %v781 = vpop.xlane.xlu0 %780
    %v782 = vsel %vm66, %v778, 0.0
    %783 = vadd.xlane.f32.xlu0 %v782
    %v784 = vpop.xlane.xlu0 %783
    %v785 = vmul.f32 %v781, %v354
    %v786 = vmul.f32 %v784, %v354
    %v787 = vadd.f32 %v785, 1e-06
    %v788 = vadd.f32 %v786, 1e-06
    %v789 = vrsqrt.pop %v787
    %v790 = vmul.f32 %v789, %v787
    %v791 = vmul.f32 %v790, %v789
    %v792 = vmul.f32 0.5, %v791
    %v793 = vsub.f32 1.5, %v792
    %v794 = vmul.f32 %v789, %v793
    %vm795 = vweird.f32 %v787
    %vm796 = vweird.f32 %v789
    %vm797 = vmor %vm795, %vm796
    %v798 = vsel %vm797, %v789, %v794
    %v799 = vrsqrt.pop %v788
    %v800 = vmul.f32 %v799, %v788
    %v801 = vmul.f32 %v800, %v799
    %v802 = vmul.f32 0.5, %v801
    %v803 = vsub.f32 1.5, %v802
    %v804 = vmul.f32 %v799, %v803
    %vm805 = vweird.f32 %v788
    %vm806 = vweird.f32 %v799
    %vm807 = vmor %vm805, %vm806
    %v808 = vsel %vm807, %v799, %v804
    %v809 = vmul.f32 %v775, %v798
    %v810 = vmul.f32 %v776, %v808
    %v811 = vperm.slane %v47, 3
    %v812 = vmul.f32 %v809, %v811
    %v813 = vmul.f32 %v810, %v811
    %v814 = vperm.slane %v47, 4
    %v815 = vadd.f32 %v812, %v814
    %v816 = vadd.f32 %v813, %v814
    %s817 = scalar_lea.vmem %s6, 16
    %v818 = vld [vmem:[%s817] sm:$0xff]
    %v819 = vld [vmem:[%s817 + $0x8] sm:$0x1f]
    %v820 = vpack.c.bf16 %v816, %v815
    %s821 = scalar_lea.vmem %s4, 48
    %v822 = vld [vmem:[%s821] sm:$0xf]
    %v823 = vld [vmem:[%s821 + $0xc] sm:$0xf]
    %v824 = vld [vmem:[%s821 + $0x18] sm:$0xf]
    %v825 = vld [vmem:[%s821 + $0x24] sm:$0xf]
    %v826 = vperm.slane %v818, 0
    %v831 = vunpack.c.l.b16 %v822
    %v832 = vunpack.c.l.b16 %v823
    %v833 = vunpack.c.l.b16 %v824
    %v834 = vunpack.c.l.b16 %v825
    %v835 = vpack.c.b16 %v832, %v831
    %v836 = vpack.c.b16 %v834, %v833
    %v840 = vsel %vm66, %v820, 0
    %842 = vmatpush.bf16.msra.mxu0 0
    %843 = vmatpush.bf16.msra.mxu0 0
    %844 = vmatpush.bf16.msra.mxu0 0
    %845 = vmatpush.bf16.msra.mxu0 0
    %846 = vmatpush.bf16.msra.mxu0 0
    %847 = vmatpush.bf16.msra.mxu0 0
    %848 = vmatpush.bf16.msra.mxu0 %v836
    %849 = vmatpush.bf16.msra.mxu0 %v835
    %850 = vmatmul.bf16.gmra.mxu0 %v840
    %v851 = vpop.f32.mrf.mxu0
    %v852 = vadd.f32 %v826, %v851
    %v853 = vpop.f32.mrf.mxu0
    %v854 = vadd.f32 %v826, %v853
    %855 = vdwg.mxu0
    %v856 = vmul.f32 %v852, %v93
    %v857 = vmul.f32 %v854, %v95
    %v858 = vmul.f32 %v852, %v97
    %v859 = vmul.f32 %v854, %v99
    %v860 = vmul.f32 %v852, %v101
    %v861 = vmul.f32 %v854, %v103
    %v862 = vmul.f32 %v852, %v105
    %v863 = vmul.f32 %v854, %v107
    %v864 = vmul.f32 %v852, %v125
    %v865 = vmul.f32 %v854, %v127
    %v866 = vmul.f32 %v852, %v129
    %v867 = vmul.f32 %v854, %v131
    %v868 = vmul.f32 %v852, %v133
    %v869 = vmul.f32 %v854, %v135
    %v870 = vmul.f32 %v852, %v137
    %v871 = vmul.f32 %v854, %v139
    %v872 = vpack.c.bf16 %v854, %v852
    %v873 = vpack.c.bf16 %v857, %v856
    %v874 = vpack.c.bf16 %v859, %v858
    %v875 = vpack.c.bf16 %v861, %v860
    %v876 = vpack.c.bf16 %v863, %v862
    %881 = vrot.lane.b32.xlu0 %v873, 96
    %v882 = vpop.permute.xlu0 %881
    %883 = vrot.lane.b32.xlu0 %v874, 96
    %v884 = vpop.permute.xlu0 %883
    %885 = vrot.lane.b32.xlu0 %v875, 96
    %v886 = vpop.permute.xlu0 %885
    %887 = vrot.lane.b32.xlu0 %v876, 96
    %v888 = vpop.permute.xlu0 %887
    %v890 = vsel %vm66, %v872, 0
    %v893 = vsel %vm66, %v882, 0
    %v896 = vsel %vm66, %v884, 0
    %v899 = vsel %vm66, %v886, 0
    %v902 = vsel %vm66, %v888, 0
    %904 = vmatpush.bf16.xpose.msra.mxu0 0
    %905 = vmatpush.bf16.xpose.msra.mxu0 0
    %906 = vmatpush.bf16.xpose.msra.mxu0 0
    %907 = vmatpush.bf16.xpose.msra.mxu0 0
    %908 = vmatpush.bf16.xpose.msra.mxu0 %v902
    %909 = vmatpush.bf16.xpose.msra.mxu0 %v899
    %910 = vmatpush.bf16.xpose.msra.mxu0 %v896
    %911 = vmatpush.bf16.xpose.msra.mxu0 %v893
    %912 = vmatmul.bf16.gmra.mxu0 %v890
    %v913 = vpop.f32.mrf.mxu0
    %v914 = vadd.f32 %v33, %v913
    %v915 = vpop.f32.mrf.mxu0
    %v916 = vadd.f32 %v34, %v915
    %917 = vdwg.mxu0
    %v918 = vsel %vm202, %v914, -inf
    %919 = vmax.xlane.f32.xlu0 %v918
    %v920 = vpop.xlane.xlu0 %919
    %v921 = vsel %vm202, %v916, -inf
    %922 = vmax.xlane.f32.xlu0 %v921
    %v923 = vpop.xlane.xlu0 %922
    %v924 = vsub.f32 %v914, %v920
    %v925 = vsub.f32 %v916, %v923
    %v926 = vmul.f32 %v924, 1.442695
    %v927 = vpow.pop %v926
    %v928 = vmul.f32 %v925, 1.442695
    %v929 = vpow.pop %v928
    %938 = vrot.lane.b32.xlu0 %v864, 64
    %v939 = vpop.permute.xlu0 %938
    %940 = vrot.lane.b32.xlu0 %v865, 64
    %v941 = vpop.permute.xlu0 %940
    %942 = vrot.lane.b32.xlu0 %v866, 64
    %v943 = vpop.permute.xlu0 %942
    %944 = vrot.lane.b32.xlu0 %v867, 64
    %v945 = vpop.permute.xlu0 %944
    %946 = vrot.lane.b32.xlu0 %v868, 64
    %v947 = vpop.permute.xlu0 %946
    %948 = vrot.lane.b32.xlu0 %v869, 64
    %v949 = vpop.permute.xlu0 %948
    %950 = vrot.lane.b32.xlu0 %v870, 64
    %v951 = vpop.permute.xlu0 %950
    %952 = vrot.lane.b32.xlu0 %v871, 64
    %v953 = vpop.permute.xlu0 %952
    %v962 = vsel %vm66, %v939, %v93
    %v963 = vsel %vm66, %v941, %v95
    %v964 = vsel %vm66, %v943, %v97
    %v965 = vsel %vm66, %v945, %v99
    %v966 = vsel %vm66, %v947, %v101
    %v967 = vsel %vm66, %v949, %v103
    %v968 = vsel %vm66, %v951, %v105
    %v969 = vsel %vm66, %v953, %v107
    %v970 = vpack.c.bf16 %v963, %v962
    %v971 = vpack.c.bf16 %v965, %v964
    %v972 = vpack.c.bf16 %v967, %v966
    %v973 = vpack.c.bf16 %v969, %v968
    %v974 = vpack.c.bf16 %v929, %v927
    %v976 = vsel %vm202, %v974, 0
    %978 = vmatpush.bf16.msra.mxu0 0
    %979 = vmatpush.bf16.msra.mxu0 0
    %980 = vmatpush.bf16.msra.mxu0 0
    %981 = vmatpush.bf16.msra.mxu0 0
    %982 = vmatpush.bf16.msra.mxu0 %v973
    %983 = vmatpush.bf16.msra.mxu0 %v972
    %984 = vmatpush.bf16.msra.mxu0 %v971
    %985 = vmatpush.bf16.msra.mxu0 %v970
    %986 = vmatmul.bf16.gmra.mxu0 %v976
    %v987 = vpop.f32.mrf.mxu0
    %v988 = vadd.f32 0.0, %v987
    %v989 = vpop.f32.mrf.mxu0
    %v990 = vadd.f32 0.0, %v989
    %991 = vdwg.mxu0
    %994 = vrot.lane.b32.xlu0 %v988, 96
    %v995 = vpop.permute.xlu0 %994
    %996 = vrot.lane.b32.xlu0 %v990, 96
    %v997 = vpop.permute.xlu0 %996
    %v1000 = vrcp.pop %v995
    %v1001 = vmul.f32 %v995, %v1000
    %v1002 = vsub.f32 1.0, %v1001
    %v1003 = vmul.f32 %v1000, %v1002
    %v1004 = vadd.f32 %v1000, %v1003
    %vm1005 = vweird.f32 %v995
    %vm1006 = vweird.f32 %v1000
    %vm1007 = vmor %vm1005, %vm1006
    %v1008 = vsel %vm1007, %v1000, %v1004
    %v1009 = vand.u32 2147483647, %v995
    %vm1010 = vcmp.eq.f32.partialorder %v1009, 8.507059e+37
    %v1011 = vand.u32 %v995, 2147483648
    %v1012 = vor.u32 1.1754944e-38, %v1011
    %v1013 = vsel %vm1010, %v1012, %v1008
    %v1014 = vmul.f32 %v988, %v1013
    %v1015 = vrcp.pop %v997
    %v1016 = vmul.f32 %v997, %v1015
    %v1017 = vsub.f32 1.0, %v1016
    %v1018 = vmul.f32 %v1015, %v1017
    %v1019 = vadd.f32 %v1015, %v1018
    %vm1020 = vweird.f32 %v997
    %vm1021 = vweird.f32 %v1015
    %vm1022 = vmor %vm1020, %vm1021
    %v1023 = vsel %vm1022, %v1015, %v1019
    %v1024 = vand.u32 2147483647, %v997
    %vm1025 = vcmp.eq.f32.partialorder %v1024, 8.507059e+37
    %v1026 = vand.u32 %v997, 2147483648
    %v1027 = vor.u32 1.1754944e-38, %v1026
    %v1028 = vsel %vm1025, %v1027, %v1023
    %v1029 = vmul.f32 %v990, %v1028
    %v1030 = vpack.c.bf16 %v1029, %v1014
    %v1031 = vperm.slane %v818, 1
    %1032 = vrot.lane.b32.xlu0 %v835, 32
    %v1033 = vpop.permute.xlu0 %1032
    %1034 = vrot.lane.b32.xlu0 %v836, 32
    %v1035 = vpop.permute.xlu0 %1034
    %v1039 = vsel %vm66, %v1030, 0
    %1041 = vmatpush.bf16.msra.mxu0 0
    %1042 = vmatpush.bf16.msra.mxu0 0
    %1043 = vmatpush.bf16.msra.mxu0 0
    %1044 = vmatpush.bf16.msra.mxu0 0
    %1045 = vmatpush.bf16.msra.mxu0 0
    %1046 = vmatpush.bf16.msra.mxu0 0
    %1047 = vmatpush.bf16.msra.mxu0 %v1035
    %1048 = vmatpush.bf16.msra.mxu0 %v1033
    %1049 = vmatmul.bf16.gmra.mxu0 %v1039
    %v1050 = vpop.f32.mrf.mxu0
    %v1051 = vadd.f32 %v1031, %v1050
    %v1052 = vpop.f32.mrf.mxu0
    %v1053 = vadd.f32 %v1031, %v1052
    %1054 = vdwg.mxu0
    %v1055 = vadd.f32 %v1051, %v815
    %v1056 = vadd.f32 %v1053, %v816
    %v1057 = vsel %vm66, %v1055, 0.0
    %1058 = vadd.xlane.f32.xlu0 %v1057
    %v1059 = vpop.xlane.xlu0 %1058
    %v1060 = vsel %vm66, %v1056, 0.0
    %1061 = vadd.xlane.f32.xlu0 %v1060
    %v1062 = vpop.xlane.xlu0 %1061
    %v1063 = vmul.f32 %v1059, %v354
    %v1064 = vmul.f32 %v1062, %v354
    %v1065 = vsub.f32 %v1055, %v1063
    %v1066 = vsub.f32 %v1056, %v1064
    %v1067 = vmul.f32 %v1065, %v1065
    %v1068 = vmul.f32 %v1066, %v1066
    %v1069 = vsel %vm66, %v1067, 0.0
    %1070 = vadd.xlane.f32.xlu0 %v1069
    %v1071 = vpop.xlane.xlu0 %1070
    %v1072 = vsel %vm66, %v1068, 0.0
    %1073 = vadd.xlane.f32.xlu0 %v1072
    %v1074 = vpop.xlane.xlu0 %1073
    %v1075 = vmul.f32 %v1071, %v354
    %v1076 = vmul.f32 %v1074, %v354
    %v1077 = vadd.f32 %v1075, 1e-06
    %v1078 = vadd.f32 %v1076, 1e-06
    %v1079 = vrsqrt.pop %v1077
    %v1080 = vmul.f32 %v1079, %v1077
    %v1081 = vmul.f32 %v1080, %v1079
    %v1082 = vmul.f32 0.5, %v1081
    %v1083 = vsub.f32 1.5, %v1082
    %v1084 = vmul.f32 %v1079, %v1083
    %vm1085 = vweird.f32 %v1077
    %vm1086 = vweird.f32 %v1079
    %vm1087 = vmor %vm1085, %vm1086
    %v1088 = vsel %vm1087, %v1079, %v1084
    %v1089 = vrsqrt.pop %v1078
    %v1090 = vmul.f32 %v1089, %v1078
    %v1091 = vmul.f32 %v1090, %v1089
    %v1092 = vmul.f32 0.5, %v1091
    %v1093 = vsub.f32 1.5, %v1092
    %v1094 = vmul.f32 %v1089, %v1093
    %vm1095 = vweird.f32 %v1078
    %vm1096 = vweird.f32 %v1089
    %vm1097 = vmor %vm1095, %vm1096
    %v1098 = vsel %vm1097, %v1089, %v1094
    %v1099 = vmul.f32 %v1065, %v1088
    %v1100 = vmul.f32 %v1066, %v1098
    %v1101 = vperm.slane %v818, 2
    %v1102 = vmul.f32 %v1099, %v1101
    %v1103 = vmul.f32 %v1100, %v1101
    %v1104 = vperm.slane %v818, 3
    %v1105 = vadd.f32 %v1102, %v1104
    %v1106 = vadd.f32 %v1103, %v1104
    %v1107 = vld [vmem:[%s821 + $0x4] sm:$0xf]
    %v1108 = vld [vmem:[%s821 + $0x10] sm:$0xf]
    %v1109 = vld [vmem:[%s821 + $0x1c] sm:$0xf]
    %v1110 = vld [vmem:[%s821 + $0x28] sm:$0xf]
    %v1111 = vperm.slane %v818, 4
    %v1116 = vunpack.c.l.b16 %v1107
    %v1117 = vunpack.c.l.b16 %v1108
    %v1118 = vunpack.c.l.b16 %v1109
    %v1119 = vunpack.c.l.b16 %v1110
    %v1120 = vpack.c.b16 %v1117, %v1116
    %v1121 = vpack.c.b16 %v1119, %v1118
    %1124 = vmatpush.bf16.msra.mxu0 0
    %1125 = vmatpush.bf16.msra.mxu0 0
    %1126 = vmatpush.bf16.msra.mxu0 0
    %1127 = vmatpush.bf16.msra.mxu0 0
    %1128 = vmatpush.bf16.msra.mxu0 0
    %1129 = vmatpush.bf16.msra.mxu0 0
    %1130 = vmatpush.bf16.msra.mxu0 %v1121
    %1131 = vmatpush.bf16.msra.mxu0 %v1120
    %1132 = vmatmul.bf16.gmra.mxu0 %v417
    %v1133 = vpop.f32.mrf.mxu0
    %v1134 = vadd.f32 %v1111, %v1133
    %v1135 = vpop.f32.mrf.mxu0
    %v1136 = vadd.f32 %v1111, %v1135
    %1137 = vdwg.mxu0
    %v1138 = vpack.c.bf16 %v1106, %v1105
    %v1139 = vperm.slane %v818, 5
    %1140 = vrot.lane.b32.xlu0 %v1120, 64
    %v1141 = vpop.permute.xlu0 %1140
    %1142 = vrot.lane.b32.xlu0 %v1121, 64
    %v1143 = vpop.permute.xlu0 %1142
    %v1147 = vsel %vm66, %v1138, 0
    %1149 = vmatpush.bf16.msra.mxu0 0
    %1150 = vmatpush.bf16.msra.mxu0 0
    %1151 = vmatpush.bf16.msra.mxu0 0
    %1152 = vmatpush.bf16.msra.mxu0 0
    %1153 = vmatpush.bf16.msra.mxu0 0
    %1154 = vmatpush.bf16.msra.mxu0 0
    %1155 = vmatpush.bf16.msra.mxu0 %v1143
    %1156 = vmatpush.bf16.msra.mxu0 %v1141
    %1157 = vmatmul.bf16.gmra.mxu0 %v1147
    %v1158 = vpop.f32.mrf.mxu0
    %v1159 = vadd.f32 %v1139, %v1158
    %v1160 = vpop.f32.mrf.mxu0
    %v1161 = vadd.f32 %v1139, %v1160
    %1162 = vdwg.mxu0
    %v1163 = vmul.f32 %v1134, %v93
    %v1164 = vmul.f32 %v1136, %v95
    %v1165 = vmul.f32 %v1134, %v97
    %v1166 = vmul.f32 %v1136, %v99
    %v1167 = vmul.f32 %v1134, %v101
    %v1168 = vmul.f32 %v1136, %v103
    %v1169 = vmul.f32 %v1134, %v105
    %v1170 = vmul.f32 %v1136, %v107
    %v1171 = vmul.f32 %v1159, %v38
    %v1172 = vmul.f32 %v1161, %v39
    %v1173 = vmul.f32 %v1159, %v40
    %v1174 = vmul.f32 %v1161, %v41
    %v1175 = vmul.f32 %v1159, %v42
    %v1176 = vmul.f32 %v1161, %v43
    %v1177 = vmul.f32 %v1159, %v44
    %v1178 = vmul.f32 %v1161, %v45
    %v1179 = vpack.c.bf16 %v1136, %v1134
    %v1180 = vpack.c.bf16 %v1164, %v1163
    %v1181 = vpack.c.bf16 %v1166, %v1165
    %v1182 = vpack.c.bf16 %v1168, %v1167
    %v1183 = vpack.c.bf16 %v1170, %v1169
    %1188 = vrot.lane.b32.xlu0 %v1180, 96
    %v1189 = vpop.permute.xlu0 %1188
    %1190 = vrot.lane.b32.xlu0 %v1181, 96
    %v1191 = vpop.permute.xlu0 %1190
    %1192 = vrot.lane.b32.xlu0 %v1182, 96
    %v1193 = vpop.permute.xlu0 %1192
    %1194 = vrot.lane.b32.xlu0 %v1183, 96
    %v1195 = vpop.permute.xlu0 %1194
    %v1197 = vsel %vm66, %v1179, 0
    %v1200 = vsel %vm66, %v1189, 0
    %v1203 = vsel %vm66, %v1191, 0
    %v1206 = vsel %vm66, %v1193, 0
    %v1209 = vsel %vm66, %v1195, 0
    %1211 = vmatpush.bf16.xpose.msra.mxu0 0
    %1212 = vmatpush.bf16.xpose.msra.mxu0 0
    %1213 = vmatpush.bf16.xpose.msra.mxu0 0
    %1214 = vmatpush.bf16.xpose.msra.mxu0 0
    %1215 = vmatpush.bf16.xpose.msra.mxu0 %v1209
    %1216 = vmatpush.bf16.xpose.msra.mxu0 %v1206
    %1217 = vmatpush.bf16.xpose.msra.mxu0 %v1203
    %1218 = vmatpush.bf16.xpose.msra.mxu0 %v1200
    %1219 = vmatmul.bf16.gmra.mxu0 %v1197
    %v1220 = vpop.f32.mrf.mxu0
    %v1221 = vadd.f32 %v36, %v1220
    %v1222 = vpop.f32.mrf.mxu0
    %v1223 = vadd.f32 %v37, %v1222
    %1224 = vdwg.mxu0
    %v1225 = vsel %vm202, %v1221, -inf
    %1226 = vmax.xlane.f32.xlu0 %v1225
    %v1227 = vpop.xlane.xlu0 %1226
    %v1228 = vsel %vm202, %v1223, -inf
    %1229 = vmax.xlane.f32.xlu0 %v1228
    %v1230 = vpop.xlane.xlu0 %1229
    %v1231 = vsub.f32 %v1221, %v1227
    %v1232 = vsub.f32 %v1223, %v1230
    %v1233 = vmul.f32 %v1231, 1.442695
    %v1234 = vpow.pop %v1233
    %v1235 = vmul.f32 %v1232, 1.442695
    %v1236 = vpow.pop %v1235
    %v1237 = vsel %vm66, %v1171, %v93
    %v1238 = vsel %vm66, %v1172, %v95
    %v1239 = vsel %vm66, %v1173, %v97
    %v1240 = vsel %vm66, %v1174, %v99
    %v1241 = vsel %vm66, %v1175, %v101
    %v1242 = vsel %vm66, %v1176, %v103
    %v1243 = vsel %vm66, %v1177, %v105
    %v1244 = vsel %vm66, %v1178, %v107
    %v1245 = vpack.c.bf16 %v1238, %v1237
    %v1246 = vpack.c.bf16 %v1240, %v1239
    %v1247 = vpack.c.bf16 %v1242, %v1241
    %v1248 = vpack.c.bf16 %v1244, %v1243
    %v1249 = vpack.c.bf16 %v1236, %v1234
    %v1251 = vsel %vm202, %v1249, 0
    %1253 = vmatpush.bf16.msra.mxu0 0
    %1254 = vmatpush.bf16.msra.mxu0 0
    %1255 = vmatpush.bf16.msra.mxu0 0
    %1256 = vmatpush.bf16.msra.mxu0 0
    %1257 = vmatpush.bf16.msra.mxu0 %v1248
    %1258 = vmatpush.bf16.msra.mxu0 %v1247
    %1259 = vmatpush.bf16.msra.mxu0 %v1246
    %1260 = vmatpush.bf16.msra.mxu0 %v1245
    %1261 = vmatmul.bf16.gmra.mxu0 %v1251
    %v1262 = vpop.f32.mrf.mxu0
    %v1263 = vadd.f32 0.0, %v1262
    %v1264 = vpop.f32.mrf.mxu0
    %v1265 = vadd.f32 0.0, %v1264
    %1266 = vdwg.mxu0
    %1269 = vrot.lane.b32.xlu0 %v1263, 96
    %v1270 = vpop.permute.xlu0 %1269
    %1271 = vrot.lane.b32.xlu0 %v1265, 96
    %v1272 = vpop.permute.xlu0 %1271
    %v1275 = vrcp.pop %v1270
    %v1276 = vmul.f32 %v1270, %v1275
    %v1277 = vsub.f32 1.0, %v1276
    %v1278 = vmul.f32 %v1275, %v1277
    %v1279 = vadd.f32 %v1275, %v1278
    %vm1280 = vweird.f32 %v1270
    %vm1281 = vweird.f32 %v1275
    %vm1282 = vmor %vm1280, %vm1281
    %v1283 = vsel %vm1282, %v1275, %v1279
    %v1284 = vand.u32 2147483647, %v1270
    %vm1285 = vcmp.eq.f32.partialorder %v1284, 8.507059e+37
    %v1286 = vand.u32 %v1270, 2147483648
    %v1287 = vor.u32 1.1754944e-38, %v1286
    %v1288 = vsel %vm1285, %v1287, %v1283
    %v1289 = vmul.f32 %v1263, %v1288
    %v1290 = vrcp.pop %v1272
    %v1291 = vmul.f32 %v1272, %v1290
    %v1292 = vsub.f32 1.0, %v1291
    %v1293 = vmul.f32 %v1290, %v1292
    %v1294 = vadd.f32 %v1290, %v1293
    %vm1295 = vweird.f32 %v1272
    %vm1296 = vweird.f32 %v1290
    %vm1297 = vmor %vm1295, %vm1296
    %v1298 = vsel %vm1297, %v1290, %v1294
    %v1299 = vand.u32 2147483647, %v1272
    %vm1300 = vcmp.eq.f32.partialorder %v1299, 8.507059e+37
    %v1301 = vand.u32 %v1272, 2147483648
    %v1302 = vor.u32 1.1754944e-38, %v1301
    %v1303 = vsel %vm1300, %v1302, %v1298
    %v1304 = vmul.f32 %v1265, %v1303
    %v1305 = vpack.c.bf16 %v1304, %v1289
    %v1306 = vperm.slane %v818, 6
    %1307 = vrot.lane.b32.xlu0 %v1120, 32
    %v1308 = vpop.permute.xlu0 %1307
    %1309 = vrot.lane.b32.xlu0 %v1121, 32
    %v1310 = vpop.permute.xlu0 %1309
    %v1314 = vsel %vm66, %v1305, 0
    %1316 = vmatpush.bf16.msra.mxu0 0
    %1317 = vmatpush.bf16.msra.mxu0 0
    %1318 = vmatpush.bf16.msra.mxu0 0
    %1319 = vmatpush.bf16.msra.mxu0 0
    %1320 = vmatpush.bf16.msra.mxu0 0
    %1321 = vmatpush.bf16.msra.mxu0 0
    %1322 = vmatpush.bf16.msra.mxu0 %v1310
    %1323 = vmatpush.bf16.msra.mxu0 %v1308
    %1324 = vmatmul.bf16.gmra.mxu0 %v1314
    %v1325 = vpop.f32.mrf.mxu0
    %v1326 = vadd.f32 %v1306, %v1325
    %v1327 = vpop.f32.mrf.mxu0
    %v1328 = vadd.f32 %v1306, %v1327
    %1329 = vdwg.mxu0
    %v1330 = vadd.f32 %v1326, %v1105
    %v1331 = vadd.f32 %v1328, %v1106
    %v1332 = vsel %vm66, %v1330, 0.0
    %1333 = vadd.xlane.f32.xlu0 %v1332
    %v1334 = vpop.xlane.xlu0 %1333
    %v1335 = vsel %vm66, %v1331, 0.0
    %1336 = vadd.xlane.f32.xlu0 %v1335
    %v1337 = vpop.xlane.xlu0 %1336
    %v1338 = vmul.f32 %v1334, %v354
    %v1339 = vmul.f32 %v1337, %v354
    %v1340 = vsub.f32 %v1330, %v1338
    %v1341 = vsub.f32 %v1331, %v1339
    %v1342 = vmul.f32 %v1340, %v1340
    %v1343 = vmul.f32 %v1341, %v1341
    %v1344 = vsel %vm66, %v1342, 0.0
    %1345 = vadd.xlane.f32.xlu0 %v1344
    %v1346 = vpop.xlane.xlu0 %1345
    %v1347 = vsel %vm66, %v1343, 0.0
    %1348 = vadd.xlane.f32.xlu0 %v1347
    %v1349 = vpop.xlane.xlu0 %1348
    %v1350 = vmul.f32 %v1346, %v354
    %v1351 = vmul.f32 %v1349, %v354
    %v1352 = vadd.f32 %v1350, 1e-06
    %v1353 = vadd.f32 %v1351, 1e-06
    %v1354 = vrsqrt.pop %v1352
    %v1355 = vmul.f32 %v1354, %v1352
    %v1356 = vmul.f32 %v1355, %v1354
    %v1357 = vmul.f32 0.5, %v1356
    %v1358 = vsub.f32 1.5, %v1357
    %v1359 = vmul.f32 %v1354, %v1358
    %vm1360 = vweird.f32 %v1352
    %vm1361 = vweird.f32 %v1354
    %vm1362 = vmor %vm1360, %vm1361
    %v1363 = vsel %vm1362, %v1354, %v1359
    %v1364 = vrsqrt.pop %v1353
    %v1365 = vmul.f32 %v1364, %v1353
    %v1366 = vmul.f32 %v1365, %v1364
    %v1367 = vmul.f32 0.5, %v1366
    %v1368 = vsub.f32 1.5, %v1367
    %v1369 = vmul.f32 %v1364, %v1368
    %vm1370 = vweird.f32 %v1353
    %vm1371 = vweird.f32 %v1364
    %vm1372 = vmor %vm1370, %vm1371
    %v1373 = vsel %vm1372, %v1364, %v1369
    %v1374 = vmul.f32 %v1340, %v1363
    %v1375 = vmul.f32 %v1341, %v1373
    %v1376 = vperm.slane %v818, 7
    %v1377 = vmul.f32 %v1374, %v1376
    %v1378 = vmul.f32 %v1375, %v1376
    %v1379 = vperm.slane %v819, 0
    %v1380 = vadd.f32 %v1377, %v1379
    %v1381 = vadd.f32 %v1378, %v1379
    %v1382 = vpack.c.bf16 %v1381, %v1380
    %v1383 = vld [vmem:[%s821 + $0x8] sm:$0xf]
    %v1384 = vld [vmem:[%s821 + $0x14] sm:$0xf]
    %v1385 = vld [vmem:[%s821 + $0x20] sm:$0xf]
    %v1386 = vld [vmem:[%s821 + $0x2c] sm:$0xf]
    %v1387 = vperm.slane %v819, 1
    %v1392 = vunpack.c.l.b16 %v1383
    %v1393 = vunpack.c.l.b16 %v1384
    %v1394 = vunpack.c.l.b16 %v1385
    %v1395 = vunpack.c.l.b16 %v1386
    %v1396 = vpack.c.b16 %v1393, %v1392
    %v1397 = vpack.c.b16 %v1395, %v1394
    %v1401 = vsel %vm66, %v1382, 0
    %1403 = vmatpush.bf16.msra.mxu0 0
    %1404 = vmatpush.bf16.msra.mxu0 0
    %1405 = vmatpush.bf16.msra.mxu0 0
    %1406 = vmatpush.bf16.msra.mxu0 0
    %1407 = vmatpush.bf16.msra.mxu0 0
    %1408 = vmatpush.bf16.msra.mxu0 0
    %1409 = vmatpush.bf16.msra.mxu0 %v1397
    %1410 = vmatpush.bf16.msra.mxu0 %v1396
    %1411 = vmatmul.bf16.gmra.mxu0 %v1401
    %v1412 = vpop.f32.mrf.mxu0
    %v1413 = vadd.f32 %v1387, %v1412
    %v1414 = vpop.f32.mrf.mxu0
    %v1415 = vadd.f32 %v1387, %v1414
    %1416 = vdwg.mxu0
    %v1417 = vmax.f32 %v1413, 0.0
    %v1418 = vmax.f32 %v1415, 0.0
    %v1419 = vpack.c.bf16 %v1418, %v1417
    %s1420 = scalar_lea.vmem %s5, 32
    %v1421 = vld [vmem:[%s1420] sm:$0xf]
    %v1422 = vld [vmem:[%s1420 + $0x4] sm:$0xf]
    %v1423 = vld [vmem:[%s1420 + $0x8] sm:$0xf]
    %v1424 = vld [vmem:[%s1420 + $0xc] sm:$0xf]
    %v1425 = vld [vmem:[%s1420 + $0x10] sm:$0xf]
    %v1426 = vld [vmem:[%s1420 + $0x14] sm:$0xf]
    %v1427 = vld [vmem:[%s1420 + $0x18] sm:$0xf]
    %v1428 = vld [vmem:[%s1420 + $0x1c] sm:$0xf]
    %v1429 = vperm.slane %v819, 2
    %v1438 = vunpack.c.l.b16 %v1421
    %v1439 = vunpack.c.l.b16 %v1422
    %v1440 = vunpack.c.l.b16 %v1423
    %v1441 = vunpack.c.l.b16 %v1424
    %v1442 = vunpack.c.l.b16 %v1425
    %v1443 = vunpack.c.l.b16 %v1426
    %v1444 = vunpack.c.l.b16 %v1427
    %v1445 = vunpack.c.l.b16 %v1428
    %v1446 = vpack.c.b16 %v1439, %v1438
    %v1447 = vpack.c.b16 %v1441, %v1440
    %v1448 = vpack.c.b16 %v1443, %v1442
    %v1449 = vpack.c.b16 %v1445, %v1444
    %v1455 = vsel %vm202, %v1419, 0
    %1457 = vmatpush.bf16.msra.mxu0 0
    %1458 = vmatpush.bf16.msra.mxu0 0
    %1459 = vmatpush.bf16.msra.mxu0 0
    %1460 = vmatpush.bf16.msra.mxu0 0
    %1461 = vmatpush.bf16.msra.mxu0 %v1449
    %1462 = vmatpush.bf16.msra.mxu0 %v1448
    %1463 = vmatpush.bf16.msra.mxu0 %v1447
    %1464 = vmatpush.bf16.msra.mxu0 %v1446
    %1465 = vmatmul.bf16.gmra.mxu0 %v1455
    %v1466 = vpop.f32.mrf.mxu0
    %v1467 = vadd.f32 %v1429, %v1466
    %v1468 = vpop.f32.mrf.mxu0
    %v1469 = vadd.f32 %v1429, %v1468
    %1470 = vdwg.mxu0
    %v1471 = vadd.f32 %v1467, %v1380
    %v1472 = vadd.f32 %v1469, %v1381
    %v1473 = vsel %vm66, %v1471, 0.0
    %1474 = vadd.xlane.f32.xlu0 %v1473
    %v1475 = vpop.xlane.xlu0 %1474
    %v1476 = vsel %vm66, %v1472, 0.0
    %1477 = vadd.xlane.f32.xlu0 %v1476
    %v1478 = vpop.xlane.xlu0 %1477
    %v1479 = vmul.f32 %v1475, %v354
    %v1480 = vmul.f32 %v1478, %v354
    %v1481 = vsub.f32 %v1471, %v1479
    %v1482 = vsub.f32 %v1472, %v1480
    %v1483 = vmul.f32 %v1481, %v1481
    %v1484 = vmul.f32 %v1482, %v1482
    %v1485 = vsel %vm66, %v1483, 0.0
    %1486 = vadd.xlane.f32.xlu0 %v1485
    %v1487 = vpop.xlane.xlu0 %1486
    %v1488 = vsel %vm66, %v1484, 0.0
    %1489 = vadd.xlane.f32.xlu0 %v1488
    %v1490 = vpop.xlane.xlu0 %1489
    %v1491 = vmul.f32 %v1487, %v354
    %v1492 = vmul.f32 %v1490, %v354
    %v1493 = vadd.f32 %v1491, 1e-06
    %v1494 = vadd.f32 %v1492, 1e-06
    %v1495 = vrsqrt.pop %v1493
    %v1496 = vmul.f32 %v1495, %v1493
    %v1497 = vmul.f32 %v1496, %v1495
    %v1498 = vmul.f32 0.5, %v1497
    %v1499 = vsub.f32 1.5, %v1498
    %v1500 = vmul.f32 %v1495, %v1499
    %vm1501 = vweird.f32 %v1493
    %vm1502 = vweird.f32 %v1495
    %vm1503 = vmor %vm1501, %vm1502
    %v1504 = vsel %vm1503, %v1495, %v1500
    %v1505 = vrsqrt.pop %v1494
    %v1506 = vmul.f32 %v1505, %v1494
    %v1507 = vmul.f32 %v1506, %v1505
    %v1508 = vmul.f32 0.5, %v1507
    %v1509 = vsub.f32 1.5, %v1508
    %v1510 = vmul.f32 %v1505, %v1509
    %vm1511 = vweird.f32 %v1494
    %vm1512 = vweird.f32 %v1505
    %vm1513 = vmor %vm1511, %vm1512
    %v1514 = vsel %vm1513, %v1505, %v1510
    %v1515 = vmul.f32 %v1481, %v1504
    %v1516 = vmul.f32 %v1482, %v1514
    %v1517 = vperm.slane %v819, 3
    %v1518 = vmul.f32 %v1515, %v1517
    %v1519 = vmul.f32 %v1516, %v1517
    %v1520 = vperm.slane %v819, 4
    %v1521 = vadd.f32 %v1518, %v1520
    %v1522 = vadd.f32 %v1519, %v1520
    %1523 = vst.msk [vmem:[#allocation2] sm:$0xff] %vm66, %v1521
    %1524 = vst.msk [vmem:[#allocation2 + $0x8] sm:$0xff] %vm66, %v1522
    // Predicated region
    $region30: #{decoder_forward.1} parent=1 // pred_check
      _
    $region31: #{decoder_forward.1} parent=1 // pred_check_branch
      %1526 = sbr.rel (0) target = $region33
    $region32: #{decoder_forward.1} parent=1 // pred_region
      %1528 = vsyncadd [#allocation3], 0
      %s1529 = sshll.u32 [#allocation2], 4
      %s1530 = int_to_ptr.vmem [resolvable:$true] %s1529
      %s1531 = sshll.u32 %s7, 4
      %s1532 = int_to_ptr.hbm [resolvable:$true] %s1531
      %1537 = dma.vmem_to_hbm [thread:$0]  %s1530, 256, %s1532, [#allocation3], 128, 128, 8
    $region33: #{decoder_forward.1} parent=1 // pred_fallthru
      _
    // Predicated region
    $region34: #{decoder_forward.1} parent=1 // pred_check
      _
    $region35: #{decoder_forward.1} parent=1 // pred_check_branch
      %1539 = sbr.rel (0) target = $region37
    $region36: #{decoder_forward.1} parent=1 // pred_region
      %1541 = dma.done [#allocation3], 256
    $region37: #{decoder_forward.1} parent=1 // pred_fallthru
      _
    %1542 = vsyncpa [#allocation3], 1

</llo_original>
